<compile_context>
chip_gen: v5e
topology: v5e:2x2
jax: 0.10.0
libtpu: 0.0.40
codegen_flags: <defaults>
</compile_context>

<pallas_src>
import jax
import jax.numpy as jnp
from jax import lax
from jax.experimental import pallas as pl
from jax.experimental.pallas import tpu as pltpu


# ---------------------------------------------------------------------------
# Pallas kernels
# ---------------------------------------------------------------------------

def matmul_bias_kernel(x_ref, w_ref, b_ref, o_ref):
    """One output tile of  x @ W + b  (f32 accumulation on the MXU)."""
    o_ref[...] = (jnp.dot(x_ref[...], w_ref[...],
                          preferred_element_type=jnp.float32)
                  + b_ref[...]).astype(o_ref.dtype)


def fused_lstm_kernel(enc_xp_ref, enc_whh_ref, dec_xp_ref, dec_whh_ref,
                      dec_h_ref):
    """Fused encoder+decoder recurrence.

    Inputs are gate pre-activations (x @ W_ih + b already hoisted), so each
    serial step only does the (B, H) x (H, 4H) recurrent matmul plus the
    elementwise cell update.  Gate columns are pre-reordered to (i, f, o, g).
    Emits the decoder hidden states (T_dec, B, H); the vocab projection is a
    separate batched matmul.
    """
    H = enc_whh_ref.shape[0]
    B = enc_xp_ref.shape[1]
    T_enc = enc_xp_ref.shape[0]
    T_dec = dec_xp_ref.shape[0]

    enc_whh = enc_whh_ref[...]
    dec_whh = dec_whh_ref[...]

    def cell(xp, h, c, whh):
        gates = xp + jnp.dot(h, whh, preferred_element_type=jnp.float32)
        sig = jax.nn.sigmoid(gates[:, :3 * H])     # i, f, o in one EUP slab
        g = jnp.tanh(gates[:, 3 * H:])
        i = sig[:, 0 * H:1 * H]
        f = sig[:, 1 * H:2 * H]
        o = sig[:, 2 * H:3 * H]
        c_new = f * c + i * g
        h_new = o * jnp.tanh(c_new)
        return h_new, c_new

    def enc_step(t, carry):
        h, c = carry
        return cell(enc_xp_ref[t], h, c, enc_whh)

    h0 = jnp.zeros((B, H), jnp.float32)
    c0 = jnp.zeros((B, H), jnp.float32)
    h, c = lax.fori_loop(0, T_enc, enc_step, (h0, c0), unroll=True)

    def dec_step(t, carry):
        h, c = carry
        h_new, c_new = cell(dec_xp_ref[t], h, c, dec_whh)
        dec_h_ref[t] = h_new
        return h_new, c_new

    lax.fori_loop(0, T_dec, dec_step, (h, c), unroll=True)


# ---------------------------------------------------------------------------
# Wrappers
# ---------------------------------------------------------------------------

def _pick_n_tile(n, pref=256):
    """Largest 128-multiple tile <= pref that divides n; else the full width."""
    if n % 128 == 0:
        t = min(pref, n)
        while n % t:
            t -= 128
        return t
    return n


def matmul_bias(x, w, b):
    """x: (M, K), w: (K, N), b: (1, N) -> (M, N) f32.  Tiled over N."""
    M, K = x.shape
    _, N = w.shape
    tn = _pick_n_tile(N)
    return pl.pallas_call(
        matmul_bias_kernel,
        out_shape=jax.ShapeDtypeStruct((M, N), jnp.float32),
        grid_spec=pltpu.PrefetchScalarGridSpec(
            num_scalar_prefetch=0,
            grid=(N // tn,),
            in_specs=[pl.BlockSpec((M, K), lambda j: (0, 0)),
                      pl.BlockSpec((K, tn), lambda j: (0, j)),
                      pl.BlockSpec((1, tn), lambda j: (0, j))],
            out_specs=pl.BlockSpec((M, tn), lambda j: (0, j))),
        compiler_params=pltpu.CompilerParams(
            dimension_semantics=("parallel",)),   # shards over TCs on v7x
    )(x, w, b)


def seq2seq_recurrence(enc_xp, enc_whh, dec_xp, dec_whh):
    """enc_xp: (T_src, B, 4H), dec_xp: (T_dec, B, 4H) gate pre-activations.
    Returns decoder hidden states (T_dec, B, H)."""
    T_enc, B, G = enc_xp.shape
    T_dec = dec_xp.shape[0]
    H = enc_whh.shape[0]
    full = lambda shape: pl.BlockSpec(shape, lambda i: tuple(0 for _ in shape))
    return pl.pallas_call(
        fused_lstm_kernel,
        out_shape=jax.ShapeDtypeStruct((T_dec, B, H), jnp.float32),
        grid_spec=pltpu.PrefetchScalarGridSpec(
            num_scalar_prefetch=0,
            grid=(1,),                      # single step: whole seq in VMEM
            in_specs=[full((T_enc, B, G)), full((H, G)),
                      full((T_dec, B, G)), full((H, G))],
            out_specs=full((T_dec, B, H))),
        compiler_params=pltpu.CompilerParams(
            dimension_semantics=("arbitrary",)),
    )(enc_xp, enc_whh, dec_xp, dec_whh)


def _reorder_gates(w):
    """Reorder gate columns (i, f, g, o) -> (i, f, o, g).  Free at prep time."""
    i, f, g, o = jnp.split(w, 4, axis=-1)
    return jnp.concatenate([i, f, o, g], axis=-1)


@jax.jit
def seq2seq_forward(source, target, params):
    """source: (T_src, B) int32 ids, target: (T_tgt, B) int32 ids.
    Returns outputs (T_tgt, B, V) with outputs[0] == 0 (as in the reference)."""
    T_tgt, B = target.shape
    H = params["enc_whh"].shape[0]
    V = params["dec_wout"].shape[1]

    # Gate-column reorder (i,f,g,o)->(i,f,o,g); constant-time weight prep.
    enc_wih = _reorder_gates(params["enc_wih"])
    enc_whh = _reorder_gates(params["enc_whh"])
    enc_b = _reorder_gates(params["enc_b"])
    dec_wih = _reorder_gates(params["dec_wih"])
    dec_whh = _reorder_gates(params["dec_whh"])
    dec_b = _reorder_gates(params["dec_b"])

    # Embedding lookups: gathers stay in plain JAX.
    src_emb = jnp.take(params["enc_emb"], source, axis=0)           # (T_src,B,E)
    dec_in_emb = jnp.take(params["dec_emb"], target[:-1], axis=0)   # (T_dec,B,E)

    T_src, _, E = src_emb.shape
    T_dec = dec_in_emb.shape[0]

    # Hoisted input projections: one big matmul each, bias folded in.
    enc_xp = matmul_bias(src_emb.reshape(T_src * B, E), enc_wih, enc_b)
    enc_xp = enc_xp.reshape(T_src, B, 4 * H)
    dec_xp = matmul_bias(dec_in_emb.reshape(T_dec * B, E), dec_wih, dec_b)
    dec_xp = dec_xp.reshape(T_dec, B, 4 * H)

    # Fused encoder + decoder recurrence (h/c never leave VMEM).
    dec_h = seq2seq_recurrence(enc_xp, enc_whh, dec_xp, dec_whh)    # (T_dec,B,H)

    # Hoisted vocab projection: one batched (T_dec*B, H) x (H, V) matmul.
    logits = matmul_bias(dec_h.reshape(T_dec * B, H),
                         params["dec_wout"], params["dec_bout"])
    logits = logits.reshape(T_dec, B, V)

    zeros_row = jnp.zeros((1, B, V), jnp.float32)
    return jnp.concatenate([zeros_row, logits], axis=0)


# ---------------------------------------------------------------------------
# Pure-JAX reference (lax.scan, PyTorch gate order) for correctness check
# ---------------------------------------------------------------------------

def _lstm_scan(x_seq, h0, c0, wih, whh, b):
    H = h0.shape[-1]

    def step(carry, x):
        h, c = carry
        gates = x @ wih + h @ whh + b
        i = jax.nn.sigmoid(gates[:, 0 * H:1 * H])
        f = jax.nn.sigmoid(gates[:, 1 * H:2 * H])
        g = jnp.tanh(gates[:, 2 * H:3 * H])
        o = jax.nn.sigmoid(gates[:, 3 * H:4 * H])
        c_new = f * c + i * g
        h_new = o * jnp.tanh(c_new)
        return (h_new, c_new), h_new

    (h, c), hs = lax.scan(step, (h0, c0), x_seq)
    return h, c, hs


def seq2seq_reference(source, target, params):
    T_tgt, B = target.shape
    V = params["dec_wout"].shape[1]
    src_emb = jnp.take(params["enc_emb"], source, axis=0)
    h0 = jnp.zeros((B, params["enc_whh"].shape[0]), jnp.float32)
    c0 = jnp.zeros_like(h0)
    h, c, _ = _lstm_scan(src_emb, h0, c0, params["enc_wih"], params["enc_whh"],
                         params["enc_b"])
    dec_in_emb = jnp.take(params["dec_emb"], target[:-1], axis=0)
    _, _, hs = _lstm_scan(dec_in_emb, h, c, params["dec_wih"], params["dec_whh"],
                          params["dec_b"])
    logits = hs @ params["dec_wout"] + params["dec_bout"]
    zeros_row = jnp.zeros((1, B, V), jnp.float32)
    return jnp.concatenate([zeros_row, logits], axis=0)


# ---------------------------------------------------------------------------
# Deterministic parameter init (PyTorch layout: gate columns i, f, g, o)
# ---------------------------------------------------------------------------

def init_params(key, src_vocab, tgt_vocab, embed_dim, hidden_dim):
    ks = jax.random.split(key, 10)
    s = 1.0 / jnp.sqrt(hidden_dim)
    u = lambda k, shape: jax.random.uniform(k, shape, jnp.float32, -s, s)
    return {
        "enc_emb": u(ks[0], (src_vocab, embed_dim)),
        "enc_wih": u(ks[1], (embed_dim, 4 * hidden_dim)),   # pre-transposed
        "enc_whh": u(ks[2], (hidden_dim, 4 * hidden_dim)),
        "enc_b": u(ks[3], (1, 4 * hidden_dim)),             # b_ih + b_hh folded
        "dec_emb": u(ks[4], (tgt_vocab, embed_dim)),
        "dec_wih": u(ks[5], (embed_dim, 4 * hidden_dim)),
        "dec_whh": u(ks[6], (hidden_dim, 4 * hidden_dim)),
        "dec_b": u(ks[7], (1, 4 * hidden_dim)),
        "dec_wout": u(ks[8], (hidden_dim, tgt_vocab)),
        "dec_bout": u(ks[9], (1, tgt_vocab)),
    }


if __name__ == "__main__":
    B = 2            # batch
    T_SRC = 8        # source sequence length
    T_TGT = 8        # target sequence length
    E = 32           # embedding dim
    H = 32           # hidden dim
    SRC_VOCAB = 32
    TGT_VOCAB = 128  # lane-dense output vocab

    key = jax.random.PRNGKey(0)
    k_par, k_src, k_tgt = jax.random.split(key, 3)
    params = init_params(k_par, SRC_VOCAB, TGT_VOCAB, E, H)

    source = jax.random.randint(k_src, (T_SRC, B), 0, SRC_VOCAB, dtype=jnp.int32)
    target = jax.random.randint(k_tgt, (T_TGT, B), 0, TGT_VOCAB, dtype=jnp.int32)

    out = seq2seq_forward(source, target, params)
    out = jax.block_until_ready(out)

    ref = seq2seq_reference(source, target, params)
    assert out.shape == (T_TGT, B, TGT_VOCAB)
    assert jnp.allclose(out, ref, atol=2e-5, rtol=1e-4), "mismatch vs reference"

    print("KERNEL_OK")
</pallas_src>

<mosaic_0001>
module attributes {stable_mosaic.version = 11 : i64} {
  func.func @matmul_bias_kernel(%arg0: i32, %arg1: memref<14x32xf32, #tpu.memory_space<vmem>>, %arg2: memref<32x128xf32, #tpu.memory_space<vmem>>, %arg3: memref<1x128xf32, #tpu.memory_space<vmem>>, %arg4: memref<14x128xf32, #tpu.memory_space<vmem>>) attributes {dimension_semantics = [#tpu.dimension_semantics<parallel>], iteration_bounds = array<i64: 1>, scalar_prefetch = 0 : i64, scratch_operands = 0 : i64, tpu.core_type = #tpu.core_type<tc>, window_params = [{pipeline_mode = #tpu.pipeline_mode<synchronous>, transform_indices = @transform_0, window_bounds = array<i64: 14, 32>}, {transform_indices = @transform_1, window_bounds = array<i64: 32, 128>}, {transform_indices = @transform_2, window_bounds = array<i64: 1, 128>}, {transform_indices = @transform_3, window_bounds = array<i64: 14, 128>}]} {
    %c0 = arith.constant 0 : index
    %c0_0 = arith.constant 0 : index
    %0 = vector.load %arg1[%c0, %c0_0] : memref<14x32xf32, #tpu.memory_space<vmem>>, vector<14x32xf32>
    %c0_1 = arith.constant 0 : index
    %c0_2 = arith.constant 0 : index
    %1 = vector.load %arg2[%c0_1, %c0_2] : memref<32x128xf32, #tpu.memory_space<vmem>>, vector<32x128xf32>
    %cst = arith.constant dense<0.000000e+00> : vector<14x128xf32>
    %2 = tpu.matmul %0, %1, %cst {dimension_numbers = #tpu.dot_dimension_numbers<[1], [0], [0], [1], [0, 0, 1, 1], [], []>} : vector<14x32xf32>, vector<32x128xf32>, vector<14x128xf32> -> vector<14x128xf32>
    %c0_3 = arith.constant 0 : index
    %c0_4 = arith.constant 0 : index
    %3 = vector.load %arg3[%c0_3, %c0_4] : memref<1x128xf32, #tpu.memory_space<vmem>>, vector<1x128xf32>
    %4 = vector.broadcast %3 : vector<1x128xf32> to vector<14x128xf32>
    %5 = arith.addf %2, %4 : vector<14x128xf32>
    %c0_5 = arith.constant 0 : index
    %c0_6 = arith.constant 0 : index
    %6 = vector.load %arg4[%c0_5, %c0_6] : memref<14x128xf32, #tpu.memory_space<vmem>>, vector<14x128xf32>
    tpu.vector_store %arg4[%c0_5, %c0_6], %5 {strides = array<i32>} : memref<14x128xf32, #tpu.memory_space<vmem>>, vector<14x128xf32>,
    return
  }
  func.func @transform_0(%arg0: i32) -> (i32, i32) {
    %c0_i32 = arith.constant 0 : i32
    %c0_i32_0 = arith.constant 0 : i32
    %c0_i32_1 = arith.constant 0 : i32
    return %c0_i32, %c0_i32_0 : i32, i32
  }
  func.func @transform_1(%arg0: i32) -> (i32, i32) {
    %c0_i32 = arith.constant 0 : i32
    %c0_i32_0 = arith.constant 0 : i32
    return %c0_i32, %arg0 : i32, i32
  }
  func.func @transform_2(%arg0: i32) -> (i32, i32) {
    %c0_i32 = arith.constant 0 : i32
    %c0_i32_0 = arith.constant 0 : i32
    return %c0_i32, %arg0 : i32, i32
  }
  func.func @transform_3(%arg0: i32) -> (i32, i32) {
    %c0_i32 = arith.constant 0 : i32
    %c0_i32_0 = arith.constant 0 : i32
    return %c0_i32, %arg0 : i32, i32
  }
}

module attributes {stable_mosaic.version = 11 : i64} {
  func.func @matmul_bias_kernel(%arg0: i32, %arg1: memref<16x32xf32, #tpu.memory_space<vmem>>, %arg2: memref<32x128xf32, #tpu.memory_space<vmem>>, %arg3: memref<1x128xf32, #tpu.memory_space<vmem>>, %arg4: memref<16x128xf32, #tpu.memory_space<vmem>>) attributes {dimension_semantics = [#tpu.dimension_semantics<parallel>], iteration_bounds = array<i64: 1>, scalar_prefetch = 0 : i64, scratch_operands = 0 : i64, tpu.core_type = #tpu.core_type<tc>, window_params = [{pipeline_mode = #tpu.pipeline_mode<synchronous>, transform_indices = @transform_0, window_bounds = array<i64: 16, 32>}, {transform_indices = @transform_1, window_bounds = array<i64: 32, 128>}, {transform_indices = @transform_2, window_bounds = array<i64: 1, 128>}, {transform_indices = @transform_3, window_bounds = array<i64: 16, 128>}]} {
    %c0 = arith.constant 0 : index
    %c0_0 = arith.constant 0 : index
    %0 = vector.load %arg1[%c0, %c0_0] : memref<16x32xf32, #tpu.memory_space<vmem>>, vector<16x32xf32>
    %c0_1 = arith.constant 0 : index
    %c0_2 = arith.constant 0 : index
    %1 = vector.load %arg2[%c0_1, %c0_2] : memref<32x128xf32, #tpu.memory_space<vmem>>, vector<32x128xf32>
    %cst = arith.constant dense<0.000000e+00> : vector<16x128xf32>
    %2 = tpu.matmul %0, %1, %cst {dimension_numbers = #tpu.dot_dimension_numbers<[1], [0], [0], [1], [0, 0, 1, 1], [], []>} : vector<16x32xf32>, vector<32x128xf32>, vector<16x128xf32> -> vector<16x128xf32>
    %c0_3 = arith.constant 0 : index
    %c0_4 = arith.constant 0 : index
    %3 = vector.load %arg3[%c0_3, %c0_4] : memref<1x128xf32, #tpu.memory_space<vmem>>, vector<1x128xf32>
    %4 = vector.broadcast %3 : vector<1x128xf32> to vector<16x128xf32>
    %5 = arith.addf %2, %4 : vector<16x128xf32>
    %c0_5 = arith.constant 0 : index
    %c0_6 = arith.constant 0 : index
    %6 = vector.load %arg4[%c0_5, %c0_6] : memref<16x128xf32, #tpu.memory_space<vmem>>, vector<16x128xf32>
    tpu.vector_store %arg4[%c0_5, %c0_6], %5 {strides = array<i32>} : memref<16x128xf32, #tpu.memory_space<vmem>>, vector<16x128xf32>,
    return
  }
  func.func @transform_0(%arg0: i32) -> (i32, i32) {
    %c0_i32 = arith.constant 0 : i32
    %c0_i32_0 = arith.constant 0 : i32
    %c0_i32_1 = arith.constant 0 : i32
    return %c0_i32, %c0_i32_0 : i32, i32
  }
  func.func @transform_1(%arg0: i32) -> (i32, i32) {
    %c0_i32 = arith.constant 0 : i32
    %c0_i32_0 = arith.constant 0 : i32
    return %c0_i32, %arg0 : i32, i32
  }
  func.func @transform_2(%arg0: i32) -> (i32, i32) {
    %c0_i32 = arith.constant 0 : i32
    %c0_i32_0 = arith.constant 0 : i32
    return %c0_i32, %arg0 : i32, i32
  }
  func.func @transform_3(%arg0: i32) -> (i32, i32) {
    %c0_i32 = arith.constant 0 : i32
    %c0_i32_0 = arith.constant 0 : i32
    return %c0_i32, %arg0 : i32, i32
  }
}

module attributes {stable_mosaic.version = 11 : i64} {
  func.func @fused_lstm_kernel(%arg0: i32, %arg1: memref<8x2x128xf32, #tpu.memory_space<vmem>>, %arg2: memref<32x128xf32, #tpu.memory_space<vmem>>, %arg3: memref<7x2x128xf32, #tpu.memory_space<vmem>>, %arg4: memref<32x128xf32, #tpu.memory_space<vmem>>, %arg5: memref<7x2x32xf32, #tpu.memory_space<vmem>>) attributes {dimension_semantics = [#tpu.dimension_semantics<arbitrary>], iteration_bounds = array<i64: 1>, scalar_prefetch = 0 : i64, scratch_operands = 0 : i64, tpu.core_type = #tpu.core_type<tc>, window_params = [{pipeline_mode = #tpu.pipeline_mode<synchronous>, transform_indices = @transform_0, window_bounds = array<i64: 8, 2, 128>}, {pipeline_mode = #tpu.pipeline_mode<synchronous>, transform_indices = @transform_1, window_bounds = array<i64: 32, 128>}, {pipeline_mode = #tpu.pipeline_mode<synchronous>, transform_indices = @transform_2, window_bounds = array<i64: 7, 2, 128>}, {pipeline_mode = #tpu.pipeline_mode<synchronous>, transform_indices = @transform_3, window_bounds = array<i64: 32, 128>}, {pipeline_mode = #tpu.pipeline_mode<synchronous>, transform_indices = @transform_4, window_bounds = array<i64: 7, 2, 32>}]} {
    %c0 = arith.constant 0 : index
    %c0_0 = arith.constant 0 : index
    %0 = vector.load %arg2[%c0, %c0_0] : memref<32x128xf32, #tpu.memory_space<vmem>>, vector<32x128xf32>
    %c0_1 = arith.constant 0 : index
    %c0_2 = arith.constant 0 : index
    %1 = vector.load %arg4[%c0_1, %c0_2] : memref<32x128xf32, #tpu.memory_space<vmem>>, vector<32x128xf32>
    %cst = arith.constant 0.000000e+00 : f32
    %2 = vector.broadcast %cst : f32 to vector<2x32xf32>
    %cst_3 = arith.constant 0.000000e+00 : f32
    %3 = vector.broadcast %cst_3 : f32 to vector<2x32xf32>
    %c0_i32 = arith.constant 0 : i32
    %4 = arith.index_cast %c0_i32 : i32 to index
    %c0_4 = arith.constant 0 : index
    %c0_5 = arith.constant 0 : index
    %5 = vector.load %arg1[%4, %c0_4, %c0_5] : memref<8x2x128xf32, #tpu.memory_space<vmem>>, vector<1x2x128xf32>
    %6 = vector.shape_cast %5 : vector<1x2x128xf32> to vector<2x128xf32>
    %cst_6 = arith.constant dense<0.000000e+00> : vector<2x128xf32>
    %7 = tpu.matmul %2, %0, %cst_6 {dimension_numbers = #tpu.dot_dimension_numbers<[1], [0], [0], [1], [0, 0, 1, 1], [], []>} : vector<2x32xf32>, vector<32x128xf32>, vector<2x128xf32> -> vector<2x128xf32>
    %8 = arith.addf %6, %7 : vector<2x128xf32>
    %9 = vector.extract_strided_slice %8 {offsets = [0, 0], sizes = [2, 96], strides = [1, 1]} : vector<2x128xf32> to vector<2x96xf32>
    %10 = arith.negf %9 : vector<2x96xf32>
    %11 = math.exp %10 : vector<2x96xf32>
    %cst_7 = arith.constant 1.000000e+00 : f32
    %12 = vector.broadcast %cst_7 : f32 to vector<2x96xf32>
    %13 = arith.addf %12, %11 : vector<2x96xf32>
    %14 = arith.divf %12, %13 : vector<2x96xf32>
    %15 = vector.extract_strided_slice %8 {offsets = [0, 96], sizes = [2, 32], strides = [1, 1]} : vector<2x128xf32> to vector<2x32xf32>
    %16 = math.tanh %15 : vector<2x32xf32>
    %17 = vector.extract_strided_slice %14 {offsets = [0, 0], sizes = [2, 32], strides = [1, 1]} : vector<2x96xf32> to vector<2x32xf32>
    %18 = vector.extract_strided_slice %14 {offsets = [0, 32], sizes = [2, 32], strides = [1, 1]} : vector<2x96xf32> to vector<2x32xf32>
    %19 = vector.extract_strided_slice %14 {offsets = [0, 64], sizes = [2, 32], strides = [1, 1]} : vector<2x96xf32> to vector<2x32xf32>
    %20 = arith.mulf %18, %3 : vector<2x32xf32>
    %21 = arith.mulf %17, %16 : vector<2x32xf32>
    %22 = arith.addf %20, %21 : vector<2x32xf32>
    %23 = math.tanh %22 : vector<2x32xf32>
    %24 = arith.mulf %19, %23 : vector<2x32xf32>
    %c1_i32 = arith.constant 1 : i32
    %25 = arith.index_cast %c1_i32 : i32 to index
    %c0_8 = arith.constant 0 : index
    %c0_9 = arith.constant 0 : index
    %26 = vector.load %arg1[%25, %c0_8, %c0_9] : memref<8x2x128xf32, #tpu.memory_space<vmem>>, vector<1x2x128xf32>
    %27 = vector.shape_cast %26 : vector<1x2x128xf32> to vector<2x128xf32>
    %cst_10 = arith.constant dense<0.000000e+00> : vector<2x128xf32>
    %28 = tpu.matmul %24, %0, %cst_10 {dimension_numbers = #tpu.dot_dimension_numbers<[1], [0], [0], [1], [0, 0, 1, 1], [], []>} : vector<2x32xf32>, vector<32x128xf32>, vector<2x128xf32> -> vector<2x128xf32>
    %29 = arith.addf %27, %28 : vector<2x128xf32>
    %30 = vector.extract_strided_slice %29 {offsets = [0, 0], sizes = [2, 96], strides = [1, 1]} : vector<2x128xf32> to vector<2x96xf32>
    %31 = arith.negf %30 : vector<2x96xf32>
    %32 = math.exp %31 : vector<2x96xf32>
    %cst_11 = arith.constant 1.000000e+00 : f32
    %33 = vector.broadcast %cst_11 : f32 to vector<2x96xf32>
    %34 = arith.addf %33, %32 : vector<2x96xf32>
    %35 = arith.divf %33, %34 : vector<2x96xf32>
    %36 = vector.extract_strided_slice %29 {offsets = [0, 96], sizes = [2, 32], strides = [1, 1]} : vector<2x128xf32> to vector<2x32xf32>
    %37 = math.tanh %36 : vector<2x32xf32>
    %38 = vector.extract_strided_slice %35 {offsets = [0, 0], sizes = [2, 32], strides = [1, 1]} : vector<2x96xf32> to vector<2x32xf32>
    %39 = vector.extract_strided_slice %35 {offsets = [0, 32], sizes = [2, 32], strides = [1, 1]} : vector<2x96xf32> to vector<2x32xf32>
    %40 = vector.extract_strided_slice %35 {offsets = [0, 64], sizes = [2, 32], strides = [1, 1]} : vector<2x96xf32> to vector<2x32xf32>
    %41 = arith.mulf %39, %22 : vector<2x32xf32>
    %42 = arith.mulf %38, %37 : vector<2x32xf32>
    %43 = arith.addf %41, %42 : vector<2x32xf32>
    %44 = math.tanh %43 : vector<2x32xf32>
    %45 = arith.mulf %40, %44 : vector<2x32xf32>
    %c2_i32 = arith.constant 2 : i32
    %46 = arith.index_cast %c2_i32 : i32 to index
    %c0_12 = arith.constant 0 : index
    %c0_13 = arith.constant 0 : index
    %47 = vector.load %arg1[%46, %c0_12, %c0_13] : memref<8x2x128xf32, #tpu.memory_space<vmem>>, vector<1x2x128xf32>
    %48 = vector.shape_cast %47 : vector<1x2x128xf32> to vector<2x128xf32>
    %cst_14 = arith.constant dense<0.000000e+00> : vector<2x128xf32>
    %49 = tpu.matmul %45, %0, %cst_14 {dimension_numbers = #tpu.dot_dimension_numbers<[1], [0], [0], [1], [0, 0, 1, 1], [], []>} : vector<2x32xf32>, vector<32x128xf32>, vector<2x128xf32> -> vector<2x128xf32>
    %50 = arith.addf %48, %49 : vector<2x128xf32>
    %51 = vector.extract_strided_slice %50 {offsets = [0, 0], sizes = [2, 96], strides = [1, 1]} : vector<2x128xf32> to vector<2x96xf32>
    %52 = arith.negf %51 : vector<2x96xf32>
    %53 = math.exp %52 : vector<2x96xf32>
    %cst_15 = arith.constant 1.000000e+00 : f32
    %54 = vector.broadcast %cst_15 : f32 to vector<2x96xf32>
    %55 = arith.addf %54, %53 : vector<2x96xf32>
    %56 = arith.divf %54, %55 : vector<2x96xf32>
    %57 = vector.extract_strided_slice %50 {offsets = [0, 96], sizes = [2, 32], strides = [1, 1]} : vector<2x128xf32> to vector<2x32xf32>
    %58 = math.tanh %57 : vector<2x32xf32>
    %59 = vector.extract_strided_slice %56 {offsets = [0, 0], sizes = [2, 32], strides = [1, 1]} : vector<2x96xf32> to vector<2x32xf32>
    %60 = vector.extract_strided_slice %56 {offsets = [0, 32], sizes = [2, 32], strides = [1, 1]} : vector<2x96xf32> to vector<2x32xf32>
    %61 = vector.extract_strided_slice %56 {offsets = [0, 64], sizes = [2, 32], strides = [1, 1]} : vector<2x96xf32> to vector<2x32xf32>
    %62 = arith.mulf %60, %43 : vector<2x32xf32>
    %63 = arith.mulf %59, %58 : vector<2x32xf32>
    %64 = arith.addf %62, %63 : vector<2x32xf32>
    %65 = math.tanh %64 : vector<2x32xf32>
    %66 = arith.mulf %61, %65 : vector<2x32xf32>
    %c3_i32 = arith.constant 3 : i32
    %67 = arith.index_cast %c3_i32 : i32 to index
    %c0_16 = arith.constant 0 : index
    %c0_17 = arith.constant 0 : index
    %68 = vector.load %arg1[%67, %c0_16, %c0_17] : memref<8x2x128xf32, #tpu.memory_space<vmem>>, vector<1x2x128xf32>
    %69 = vector.shape_cast %68 : vector<1x2x128xf32> to vector<2x128xf32>
    %cst_18 = arith.constant dense<0.000000e+00> : vector<2x128xf32>
    %70 = tpu.matmul %66, %0, %cst_18 {dimension_numbers = #tpu.dot_dimension_numbers<[1], [0], [0], [1], [0, 0, 1, 1], [], []>} : vector<2x32xf32>, vector<32x128xf32>, vector<2x128xf32> -> vector<2x128xf32>
    %71 = arith.addf %69, %70 : vector<2x128xf32>
    %72 = vector.extract_strided_slice %71 {offsets = [0, 0], sizes = [2, 96], strides = [1, 1]} : vector<2x128xf32> to vector<2x96xf32>
    %73 = arith.negf %72 : vector<2x96xf32>
    %74 = math.exp %73 : vector<2x96xf32>
    %cst_19 = arith.constant 1.000000e+00 : f32
    %75 = vector.broadcast %cst_19 : f32 to vector<2x96xf32>
    %76 = arith.addf %75, %74 : vector<2x96xf32>
    %77 = arith.divf %75, %76 : vector<2x96xf32>
    %78 = vector.extract_strided_slice %71 {offsets = [0, 96], sizes = [2, 32], strides = [1, 1]} : vector<2x128xf32> to vector<2x32xf32>
    %79 = math.tanh %78 : vector<2x32xf32>
    %80 = vector.extract_strided_slice %77 {offsets = [0, 0], sizes = [2, 32], strides = [1, 1]} : vector<2x96xf32> to vector<2x32xf32>
    %81 = vector.extract_strided_slice %77 {offsets = [0, 32], sizes = [2, 32], strides = [1, 1]} : vector<2x96xf32> to vector<2x32xf32>
    %82 = vector.extract_strided_slice %77 {offsets = [0, 64], sizes = [2, 32], strides = [1, 1]} : vector<2x96xf32> to vector<2x32xf32>
    %83 = arith.mulf %81, %64 : vector<2x32xf32>
    %84 = arith.mulf %80, %79 : vector<2x32xf32>
    %85 = arith.addf %83, %84 : vector<2x32xf32>
    %86 = math.tanh %85 : vector<2x32xf32>
    %87 = arith.mulf %82, %86 : vector<2x32xf32>
    %c4_i32 = arith.constant 4 : i32
    %88 = arith.index_cast %c4_i32 : i32 to index
    %c0_20 = arith.constant 0 : index
    %c0_21 = arith.constant 0 : index
    %89 = vector.load %arg1[%88, %c0_20, %c0_21] : memref<8x2x128xf32, #tpu.memory_space<vmem>>, vector<1x2x128xf32>
    %90 = vector.shape_cast %89 : vector<1x2x128xf32> to vector<2x128xf32>
    %cst_22 = arith.constant dense<0.000000e+00> : vector<2x128xf32>
    %91 = tpu.matmul %87, %0, %cst_22 {dimension_numbers = #tpu.dot_dimension_numbers<[1], [0], [0], [1], [0, 0, 1, 1], [], []>} : vector<2x32xf32>, vector<32x128xf32>, vector<2x128xf32> -> vector<2x128xf32>
    %92 = arith.addf %90, %91 : vector<2x128xf32>
    %93 = vector.extract_strided_slice %92 {offsets = [0, 0], sizes = [2, 96], strides = [1, 1]} : vector<2x128xf32> to vector<2x96xf32>
    %94 = arith.negf %93 : vector<2x96xf32>
    %95 = math.exp %94 : vector<2x96xf32>
    %cst_23 = arith.constant 1.000000e+00 : f32
    %96 = vector.broadcast %cst_23 : f32 to vector<2x96xf32>
    %97 = arith.addf %96, %95 : vector<2x96xf32>
    %98 = arith.divf %96, %97 : vector<2x96xf32>
    %99 = vector.extract_strided_slice %92 {offsets = [0, 96], sizes = [2, 32], strides = [1, 1]} : vector<2x128xf32> to vector<2x32xf32>
    %100 = math.tanh %99 : vector<2x32xf32>
    %101 = vector.extract_strided_slice %98 {offsets = [0, 0], sizes = [2, 32], strides = [1, 1]} : vector<2x96xf32> to vector<2x32xf32>
    %102 = vector.extract_strided_slice %98 {offsets = [0, 32], sizes = [2, 32], strides = [1, 1]} : vector<2x96xf32> to vector<2x32xf32>
    %103 = vector.extract_strided_slice %98 {offsets = [0, 64], sizes = [2, 32], strides = [1, 1]} : vector<2x96xf32> to vector<2x32xf32>
    %104 = arith.mulf %102, %85 : vector<2x32xf32>
    %105 = arith.mulf %101, %100 : vector<2x32xf32>
    %106 = arith.addf %104, %105 : vector<2x32xf32>
    %107 = math.tanh %106 : vector<2x32xf32>
    %108 = arith.mulf %103, %107 : vector<2x32xf32>
    %c5_i32 = arith.constant 5 : i32
    %109 = arith.index_cast %c5_i32 : i32 to index
    %c0_24 = arith.constant 0 : index
    %c0_25 = arith.constant 0 : index
    %110 = vector.load %arg1[%109, %c0_24, %c0_25] : memref<8x2x128xf32, #tpu.memory_space<vmem>>, vector<1x2x128xf32>
    %111 = vector.shape_cast %110 : vector<1x2x128xf32> to vector<2x128xf32>
    %cst_26 = arith.constant dense<0.000000e+00> : vector<2x128xf32>
    %112 = tpu.matmul %108, %0, %cst_26 {dimension_numbers = #tpu.dot_dimension_numbers<[1], [0], [0], [1], [0, 0, 1, 1], [], []>} : vector<2x32xf32>, vector<32x128xf32>, vector<2x128xf32> -> vector<2x128xf32>
    %113 = arith.addf %111, %112 : vector<2x128xf32>
    %114 = vector.extract_strided_slice %113 {offsets = [0, 0], sizes = [2, 96], strides = [1, 1]} : vector<2x128xf32> to vector<2x96xf32>
    %115 = arith.negf %114 : vector<2x96xf32>
    %116 = math.exp %115 : vector<2x96xf32>
    %cst_27 = arith.constant 1.000000e+00 : f32
    %117 = vector.broadcast %cst_27 : f32 to vector<2x96xf32>
    %118 = arith.addf %117, %116 : vector<2x96xf32>
    %119 = arith.divf %117, %118 : vector<2x96xf32>
    %120 = vector.extract_strided_slice %113 {offsets = [0, 96], sizes = [2, 32], strides = [1, 1]} : vector<2x128xf32> to vector<2x32xf32>
    %121 = math.tanh %120 : vector<2x32xf32>
    %122 = vector.extract_strided_slice %119 {offsets = [0, 0], sizes = [2, 32], strides = [1, 1]} : vector<2x96xf32> to vector<2x32xf32>
    %123 = vector.extract_strided_slice %119 {offsets = [0, 32], sizes = [2, 32], strides = [1, 1]} : vector<2x96xf32> to vector<2x32xf32>
    %124 = vector.extract_strided_slice %119 {offsets = [0, 64], sizes = [2, 32], strides = [1, 1]} : vector<2x96xf32> to vector<2x32xf32>
    %125 = arith.mulf %123, %106 : vector<2x32xf32>
    %126 = arith.mulf %122, %121 : vector<2x32xf32>
    %127 = arith.addf %125, %126 : vector<2x32xf32>
    %128 = math.tanh %127 : vector<2x32xf32>
    %129 = arith.mulf %124, %128 : vector<2x32xf32>
    %c6_i32 = arith.constant 6 : i32
    %130 = arith.index_cast %c6_i32 : i32 to index
    %c0_28 = arith.constant 0 : index
    %c0_29 = arith.constant 0 : index
    %131 = vector.load %arg1[%130, %c0_28, %c0_29] : memref<8x2x128xf32, #tpu.memory_space<vmem>>, vector<1x2x128xf32>
    %132 = vector.shape_cast %131 : vector<1x2x128xf32> to vector<2x128xf32>
    %cst_30 = arith.constant dense<0.000000e+00> : vector<2x128xf32>
    %133 = tpu.matmul %129, %0, %cst_30 {dimension_numbers = #tpu.dot_dimension_numbers<[1], [0], [0], [1], [0, 0, 1, 1], [], []>} : vector<2x32xf32>, vector<32x128xf32>, vector<2x128xf32> -> vector<2x128xf32>
    %134 = arith.addf %132, %133 : vector<2x128xf32>
    %135 = vector.extract_strided_slice %134 {offsets = [0, 0], sizes = [2, 96], strides = [1, 1]} : vector<2x128xf32> to vector<2x96xf32>
    %136 = arith.negf %135 : vector<2x96xf32>
    %137 = math.exp %136 : vector<2x96xf32>
    %cst_31 = arith.constant 1.000000e+00 : f32
    %138 = vector.broadcast %cst_31 : f32 to vector<2x96xf32>
    %139 = arith.addf %138, %137 : vector<2x96xf32>
    %140 = arith.divf %138, %139 : vector<2x96xf32>
    %141 = vector.extract_strided_slice %134 {offsets = [0, 96], sizes = [2, 32], strides = [1, 1]} : vector<2x128xf32> to vector<2x32xf32>
    %142 = math.tanh %141 : vector<2x32xf32>
    %143 = vector.extract_strided_slice %140 {offsets = [0, 0], sizes = [2, 32], strides = [1, 1]} : vector<2x96xf32> to vector<2x32xf32>
    %144 = vector.extract_strided_slice %140 {offsets = [0, 32], sizes = [2, 32], strides = [1, 1]} : vector<2x96xf32> to vector<2x32xf32>
    %145 = vector.extract_strided_slice %140 {offsets = [0, 64], sizes = [2, 32], strides = [1, 1]} : vector<2x96xf32> to vector<2x32xf32>
    %146 = arith.mulf %144, %127 : vector<2x32xf32>
    %147 = arith.mulf %143, %142 : vector<2x32xf32>
    %148 = arith.addf %146, %147 : vector<2x32xf32>
    %149 = math.tanh %148 : vector<2x32xf32>
    %150 = arith.mulf %145, %149 : vector<2x32xf32>
    %c7_i32 = arith.constant 7 : i32
    %151 = arith.index_cast %c7_i32 : i32 to index
    %c0_32 = arith.constant 0 : index
    %c0_33 = arith.constant 0 : index
    %152 = vector.load %arg1[%151, %c0_32, %c0_33] : memref<8x2x128xf32, #tpu.memory_space<vmem>>, vector<1x2x128xf32>
    %153 = vector.shape_cast %152 : vector<1x2x128xf32> to vector<2x128xf32>
    %cst_34 = arith.constant dense<0.000000e+00> : vector<2x128xf32>
    %154 = tpu.matmul %150, %0, %cst_34 {dimension_numbers = #tpu.dot_dimension_numbers<[1], [0], [0], [1], [0, 0, 1, 1], [], []>} : vector<2x32xf32>, vector<32x128xf32>, vector<2x128xf32> -> vector<2x128xf32>
    %155 = arith.addf %153, %154 : vector<2x128xf32>
    %156 = vector.extract_strided_slice %155 {offsets = [0, 0], sizes = [2, 96], strides = [1, 1]} : vector<2x128xf32> to vector<2x96xf32>
    %157 = arith.negf %156 : vector<2x96xf32>
    %158 = math.exp %157 : vector<2x96xf32>
    %cst_35 = arith.constant 1.000000e+00 : f32
    %159 = vector.broadcast %cst_35 : f32 to vector<2x96xf32>
    %160 = arith.addf %159, %158 : vector<2x96xf32>
    %161 = arith.divf %159, %160 : vector<2x96xf32>
    %162 = vector.extract_strided_slice %155 {offsets = [0, 96], sizes = [2, 32], strides = [1, 1]} : vector<2x128xf32> to vector<2x32xf32>
    %163 = math.tanh %162 : vector<2x32xf32>
    %164 = vector.extract_strided_slice %161 {offsets = [0, 0], sizes = [2, 32], strides = [1, 1]} : vector<2x96xf32> to vector<2x32xf32>
    %165 = vector.extract_strided_slice %161 {offsets = [0, 32], sizes = [2, 32], strides = [1, 1]} : vector<2x96xf32> to vector<2x32xf32>
    %166 = vector.extract_strided_slice %161 {offsets = [0, 64], sizes = [2, 32], strides = [1, 1]} : vector<2x96xf32> to vector<2x32xf32>
    %167 = arith.mulf %165, %148 : vector<2x32xf32>
    %168 = arith.mulf %164, %163 : vector<2x32xf32>
    %169 = arith.addf %167, %168 : vector<2x32xf32>
    %170 = math.tanh %169 : vector<2x32xf32>
    %171 = arith.mulf %166, %170 : vector<2x32xf32>
    %c8_i32 = arith.constant 8 : i32
    %c0_i32_36 = arith.constant 0 : i32
    %172 = arith.index_cast %c0_i32_36 : i32 to index
    %c0_37 = arith.constant 0 : index
    %c0_38 = arith.constant 0 : index
    %173 = vector.load %arg3[%172, %c0_37, %c0_38] : memref<7x2x128xf32, #tpu.memory_space<vmem>>, vector<1x2x128xf32>
    %174 = vector.shape_cast %173 : vector<1x2x128xf32> to vector<2x128xf32>
    %cst_39 = arith.constant dense<0.000000e+00> : vector<2x128xf32>
    %175 = tpu.matmul %171, %1, %cst_39 {dimension_numbers = #tpu.dot_dimension_numbers<[1], [0], [0], [1], [0, 0, 1, 1], [], []>} : vector<2x32xf32>, vector<32x128xf32>, vector<2x128xf32> -> vector<2x128xf32>
    %176 = arith.addf %174, %175 : vector<2x128xf32>
    %177 = vector.extract_strided_slice %176 {offsets = [0, 0], sizes = [2, 96], strides = [1, 1]} : vector<2x128xf32> to vector<2x96xf32>
    %178 = arith.negf %177 : vector<2x96xf32>
    %179 = math.exp %178 : vector<2x96xf32>
    %cst_40 = arith.constant 1.000000e+00 : f32
    %180 = vector.broadcast %cst_40 : f32 to vector<2x96xf32>
    %181 = arith.addf %180, %179 : vector<2x96xf32>
    %182 = arith.divf %180, %181 : vector<2x96xf32>
    %183 = vector.extract_strided_slice %176 {offsets = [0, 96], sizes = [2, 32], strides = [1, 1]} : vector<2x128xf32> to vector<2x32xf32>
    %184 = math.tanh %183 : vector<2x32xf32>
    %185 = vector.extract_strided_slice %182 {offsets = [0, 0], sizes = [2, 32], strides = [1, 1]} : vector<2x96xf32> to vector<2x32xf32>
    %186 = vector.extract_strided_slice %182 {offsets = [0, 32], sizes = [2, 32], strides = [1, 1]} : vector<2x96xf32> to vector<2x32xf32>
    %187 = vector.extract_strided_slice %182 {offsets = [0, 64], sizes = [2, 32], strides = [1, 1]} : vector<2x96xf32> to vector<2x32xf32>
    %188 = arith.mulf %186, %169 : vector<2x32xf32>
    %189 = arith.mulf %185, %184 : vector<2x32xf32>
    %190 = arith.addf %188, %189 : vector<2x32xf32>
    %191 = math.tanh %190 : vector<2x32xf32>
    %192 = arith.mulf %187, %191 : vector<2x32xf32>
    %193 = arith.index_cast %c0_i32_36 : i32 to index
    %c0_41 = arith.constant 0 : index
    %c0_42 = arith.constant 0 : index
    %194 = vector.load %arg5[%193, %c0_41, %c0_42] : memref<7x2x32xf32, #tpu.memory_space<vmem>>, vector<1x2x32xf32>
    %195 = vector.shape_cast %194 : vector<1x2x32xf32> to vector<2x32xf32>
    %196 = vector.shape_cast %192 : vector<2x32xf32> to vector<1x2x32xf32>
    tpu.vector_store %arg5[%193, %c0_41, %c0_42], %196 {strides = array<i32>} : memref<7x2x32xf32, #tpu.memory_space<vmem>>, vector<1x2x32xf32>,
    %c1_i32_43 = arith.constant 1 : i32
    %197 = arith.index_cast %c1_i32_43 : i32 to index
    %c0_44 = arith.constant 0 : index
    %c0_45 = arith.constant 0 : index
    %198 = vector.load %arg3[%197, %c0_44, %c0_45] : memref<7x2x128xf32, #tpu.memory_space<vmem>>, vector<1x2x128xf32>
    %199 = vector.shape_cast %198 : vector<1x2x128xf32> to vector<2x128xf32>
    %cst_46 = arith.constant dense<0.000000e+00> : vector<2x128xf32>
    %200 = tpu.matmul %192, %1, %cst_46 {dimension_numbers = #tpu.dot_dimension_numbers<[1], [0], [0], [1], [0, 0, 1, 1], [], []>} : vector<2x32xf32>, vector<32x128xf32>, vector<2x128xf32> -> vector<2x128xf32>
    %201 = arith.addf %199, %200 : vector<2x128xf32>
    %202 = vector.extract_strided_slice %201 {offsets = [0, 0], sizes = [2, 96], strides = [1, 1]} : vector<2x128xf32> to vector<2x96xf32>
    %203 = arith.negf %202 : vector<2x96xf32>
    %204 = math.exp %203 : vector<2x96xf32>
    %cst_47 = arith.constant 1.000000e+00 : f32
    %205 = vector.broadcast %cst_47 : f32 to vector<2x96xf32>
    %206 = arith.addf %205, %204 : vector<2x96xf32>
    %207 = arith.divf %205, %206 : vector<2x96xf32>
    %208 = vector.extract_strided_slice %201 {offsets = [0, 96], sizes = [2, 32], strides = [1, 1]} : vector<2x128xf32> to vector<2x32xf32>
    %209 = math.tanh %208 : vector<2x32xf32>
    %210 = vector.extract_strided_slice %207 {offsets = [0, 0], sizes = [2, 32], strides = [1, 1]} : vector<2x96xf32> to vector<2x32xf32>
    %211 = vector.extract_strided_slice %207 {offsets = [0, 32], sizes = [2, 32], strides = [1, 1]} : vector<2x96xf32> to vector<2x32xf32>
    %212 = vector.extract_strided_slice %207 {offsets = [0, 64], sizes = [2, 32], strides = [1, 1]} : vector<2x96xf32> to vector<2x32xf32>
    %213 = arith.mulf %211, %190 : vector<2x32xf32>
    %214 = arith.mulf %210, %209 : vector<2x32xf32>
    %215 = arith.addf %213, %214 : vector<2x32xf32>
    %216 = math.tanh %215 : vector<2x32xf32>
    %217 = arith.mulf %212, %216 : vector<2x32xf32>
    %218 = arith.index_cast %c1_i32_43 : i32 to index
    %c0_48 = arith.constant 0 : index
    %c0_49 = arith.constant 0 : index
    %219 = vector.load %arg5[%218, %c0_48, %c0_49] : memref<7x2x32xf32, #tpu.memory_space<vmem>>, vector<1x2x32xf32>
    %220 = vector.shape_cast %219 : vector<1x2x32xf32> to vector<2x32xf32>
    %221 = vector.shape_cast %217 : vector<2x32xf32> to vector<1x2x32xf32>
    tpu.vector_store %arg5[%218, %c0_48, %c0_49], %221 {strides = array<i32>} : memref<7x2x32xf32, #tpu.memory_space<vmem>>, vector<1x2x32xf32>,
    %c2_i32_50 = arith.constant 2 : i32
    %222 = arith.index_cast %c2_i32_50 : i32 to index
    %c0_51 = arith.constant 0 : index
    %c0_52 = arith.constant 0 : index
    %223 = vector.load %arg3[%222, %c0_51, %c0_52] : memref<7x2x128xf32, #tpu.memory_space<vmem>>, vector<1x2x128xf32>
    %224 = vector.shape_cast %223 : vector<1x2x128xf32> to vector<2x128xf32>
    %cst_53 = arith.constant dense<0.000000e+00> : vector<2x128xf32>
    %225 = tpu.matmul %217, %1, %cst_53 {dimension_numbers = #tpu.dot_dimension_numbers<[1], [0], [0], [1], [0, 0, 1, 1], [], []>} : vector<2x32xf32>, vector<32x128xf32>, vector<2x128xf32> -> vector<2x128xf32>
    %226 = arith.addf %224, %225 : vector<2x128xf32>
    %227 = vector.extract_strided_slice %226 {offsets = [0, 0], sizes = [2, 96], strides = [1, 1]} : vector<2x128xf32> to vector<2x96xf32>
    %228 = arith.negf %227 : vector<2x96xf32>
    %229 = math.exp %228 : vector<2x96xf32>
    %cst_54 = arith.constant 1.000000e+00 : f32
    %230 = vector.broadcast %cst_54 : f32 to vector<2x96xf32>
    %231 = arith.addf %230, %229 : vector<2x96xf32>
    %232 = arith.divf %230, %231 : vector<2x96xf32>
    %233 = vector.extract_strided_slice %226 {offsets = [0, 96], sizes = [2, 32], strides = [1, 1]} : vector<2x128xf32> to vector<2x32xf32>
    %234 = math.tanh %233 : vector<2x32xf32>
    %235 = vector.extract_strided_slice %232 {offsets = [0, 0], sizes = [2, 32], strides = [1, 1]} : vector<2x96xf32> to vector<2x32xf32>
    %236 = vector.extract_strided_slice %232 {offsets = [0, 32], sizes = [2, 32], strides = [1, 1]} : vector<2x96xf32> to vector<2x32xf32>
    %237 = vector.extract_strided_slice %232 {offsets = [0, 64], sizes = [2, 32], strides = [1, 1]} : vector<2x96xf32> to vector<2x32xf32>
    %238 = arith.mulf %236, %215 : vector<2x32xf32>
    %239 = arith.mulf %235, %234 : vector<2x32xf32>
    %240 = arith.addf %238, %239 : vector<2x32xf32>
    %241 = math.tanh %240 : vector<2x32xf32>
    %242 = arith.mulf %237, %241 : vector<2x32xf32>
    %243 = arith.index_cast %c2_i32_50 : i32 to index
    %c0_55 = arith.constant 0 : index
    %c0_56 = arith.constant 0 : index
    %244 = vector.load %arg5[%243, %c0_55, %c0_56] : memref<7x2x32xf32, #tpu.memory_space<vmem>>, vector<1x2x32xf32>
    %245 = vector.shape_cast %244 : vector<1x2x32xf32> to vector<2x32xf32>
    %246 = vector.shape_cast %242 : vector<2x32xf32> to vector<1x2x32xf32>
    tpu.vector_store %arg5[%243, %c0_55, %c0_56], %246 {strides = array<i32>} : memref<7x2x32xf32, #tpu.memory_space<vmem>>, vector<1x2x32xf32>,
    %c3_i32_57 = arith.constant 3 : i32
    %247 = arith.index_cast %c3_i32_57 : i32 to index
    %c0_58 = arith.constant 0 : index
    %c0_59 = arith.constant 0 : index
    %248 = vector.load %arg3[%247, %c0_58, %c0_59] : memref<7x2x128xf32, #tpu.memory_space<vmem>>, vector<1x2x128xf32>
    %249 = vector.shape_cast %248 : vector<1x2x128xf32> to vector<2x128xf32>
    %cst_60 = arith.constant dense<0.000000e+00> : vector<2x128xf32>
    %250 = tpu.matmul %242, %1, %cst_60 {dimension_numbers = #tpu.dot_dimension_numbers<[1], [0], [0], [1], [0, 0, 1, 1], [], []>} : vector<2x32xf32>, vector<32x128xf32>, vector<2x128xf32> -> vector<2x128xf32>
    %251 = arith.addf %249, %250 : vector<2x128xf32>
    %252 = vector.extract_strided_slice %251 {offsets = [0, 0], sizes = [2, 96], strides = [1, 1]} : vector<2x128xf32> to vector<2x96xf32>
    %253 = arith.negf %252 : vector<2x96xf32>
    %254 = math.exp %253 : vector<2x96xf32>
    %cst_61 = arith.constant 1.000000e+00 : f32
    %255 = vector.broadcast %cst_61 : f32 to vector<2x96xf32>
    %256 = arith.addf %255, %254 : vector<2x96xf32>
    %257 = arith.divf %255, %256 : vector<2x96xf32>
    %258 = vector.extract_strided_slice %251 {offsets = [0, 96], sizes = [2, 32], strides = [1, 1]} : vector<2x128xf32> to vector<2x32xf32>
    %259 = math.tanh %258 : vector<2x32xf32>
    %260 = vector.extract_strided_slice %257 {offsets = [0, 0], sizes = [2, 32], strides = [1, 1]} : vector<2x96xf32> to vector<2x32xf32>
    %261 = vector.extract_strided_slice %257 {offsets = [0, 32], sizes = [2, 32], strides = [1, 1]} : vector<2x96xf32> to vector<2x32xf32>
    %262 = vector.extract_strided_slice %257 {offsets = [0, 64], sizes = [2, 32], strides = [1, 1]} : vector<2x96xf32> to vector<2x32xf32>
    %263 = arith.mulf %261, %240 : vector<2x32xf32>
    %264 = arith.mulf %260, %259 : vector<2x32xf32>
    %265 = arith.addf %263, %264 : vector<2x32xf32>
    %266 = math.tanh %265 : vector<2x32xf32>
    %267 = arith.mulf %262, %266 : vector<2x32xf32>
    %268 = arith.index_cast %c3_i32_57 : i32 to index
    %c0_62 = arith.constant 0 : index
    %c0_63 = arith.constant 0 : index
    %269 = vector.load %arg5[%268, %c0_62, %c0_63] : memref<7x2x32xf32, #tpu.memory_space<vmem>>, vector<1x2x32xf32>
    %270 = vector.shape_cast %269 : vector<1x2x32xf32> to vector<2x32xf32>
    %271 = vector.shape_cast %267 : vector<2x32xf32> to vector<1x2x32xf32>
    tpu.vector_store %arg5[%268, %c0_62, %c0_63], %271 {strides = array<i32>} : memref<7x2x32xf32, #tpu.memory_space<vmem>>, vector<1x2x32xf32>,
    %c4_i32_64 = arith.constant 4 : i32
    %272 = arith.index_cast %c4_i32_64 : i32 to index
    %c0_65 = arith.constant 0 : index
    %c0_66 = arith.constant 0 : index
    %273 = vector.load %arg3[%272, %c0_65, %c0_66] : memref<7x2x128xf32, #tpu.memory_space<vmem>>, vector<1x2x128xf32>
    %274 = vector.shape_cast %273 : vector<1x2x128xf32> to vector<2x128xf32>
    %cst_67 = arith.constant dense<0.000000e+00> : vector<2x128xf32>
    %275 = tpu.matmul %267, %1, %cst_67 {dimension_numbers = #tpu.dot_dimension_numbers<[1], [0], [0], [1], [0, 0, 1, 1], [], []>} : vector<2x32xf32>, vector<32x128xf32>, vector<2x128xf32> -> vector<2x128xf32>
    %276 = arith.addf %274, %275 : vector<2x128xf32>
    %277 = vector.extract_strided_slice %276 {offsets = [0, 0], sizes = [2, 96], strides = [1, 1]} : vector<2x128xf32> to vector<2x96xf32>
    %278 = arith.negf %277 : vector<2x96xf32>
    %279 = math.exp %278 : vector<2x96xf32>
    %cst_68 = arith.constant 1.000000e+00 : f32
    %280 = vector.broadcast %cst_68 : f32 to vector<2x96xf32>
    %281 = arith.addf %280, %279 : vector<2x96xf32>
    %282 = arith.divf %280, %281 : vector<2x96xf32>
    %283 = vector.extract_strided_slice %276 {offsets = [0, 96], sizes = [2, 32], strides = [1, 1]} : vector<2x128xf32> to vector<2x32xf32>
    %284 = math.tanh %283 : vector<2x32xf32>
    %285 = vector.extract_strided_slice %282 {offsets = [0, 0], sizes = [2, 32], strides = [1, 1]} : vector<2x96xf32> to vector<2x32xf32>
    %286 = vector.extract_strided_slice %282 {offsets = [0, 32], sizes = [2, 32], strides = [1, 1]} : vector<2x96xf32> to vector<2x32xf32>
    %287 = vector.extract_strided_slice %282 {offsets = [0, 64], sizes = [2, 32], strides = [1, 1]} : vector<2x96xf32> to vector<2x32xf32>
    %288 = arith.mulf %286, %265 : vector<2x32xf32>
    %289 = arith.mulf %285, %284 : vector<2x32xf32>
    %290 = arith.addf %288, %289 : vector<2x32xf32>
    %291 = math.tanh %290 : vector<2x32xf32>
    %292 = arith.mulf %287, %291 : vector<2x32xf32>
    %293 = arith.index_cast %c4_i32_64 : i32 to index
    %c0_69 = arith.constant 0 : index
    %c0_70 = arith.constant 0 : index
    %294 = vector.load %arg5[%293, %c0_69, %c0_70] : memref<7x2x32xf32, #tpu.memory_space<vmem>>, vector<1x2x32xf32>
    %295 = vector.shape_cast %294 : vector<1x2x32xf32> to vector<2x32xf32>
    %296 = vector.shape_cast %292 : vector<2x32xf32> to vector<1x2x32xf32>
    tpu.vector_store %arg5[%293, %c0_69, %c0_70], %296 {strides = array<i32>} : memref<7x2x32xf32, #tpu.memory_space<vmem>>, vector<1x2x32xf32>,
    %c5_i32_71 = arith.constant 5 : i32
    %297 = arith.index_cast %c5_i32_71 : i32 to index
    %c0_72 = arith.constant 0 : index
    %c0_73 = arith.constant 0 : index
    %298 = vector.load %arg3[%297, %c0_72, %c0_73] : memref<7x2x128xf32, #tpu.memory_space<vmem>>, vector<1x2x128xf32>
    %299 = vector.shape_cast %298 : vector<1x2x128xf32> to vector<2x128xf32>
    %cst_74 = arith.constant dense<0.000000e+00> : vector<2x128xf32>
    %300 = tpu.matmul %292, %1, %cst_74 {dimension_numbers = #tpu.dot_dimension_numbers<[1], [0], [0], [1], [0, 0, 1, 1], [], []>} : vector<2x32xf32>, vector<32x128xf32>, vector<2x128xf32> -> vector<2x128xf32>
    %301 = arith.addf %299, %300 : vector<2x128xf32>
    %302 = vector.extract_strided_slice %301 {offsets = [0, 0], sizes = [2, 96], strides = [1, 1]} : vector<2x128xf32> to vector<2x96xf32>
    %303 = arith.negf %302 : vector<2x96xf32>
    %304 = math.exp %303 : vector<2x96xf32>
    %cst_75 = arith.constant 1.000000e+00 : f32
    %305 = vector.broadcast %cst_75 : f32 to vector<2x96xf32>
    %306 = arith.addf %305, %304 : vector<2x96xf32>
    %307 = arith.divf %305, %306 : vector<2x96xf32>
    %308 = vector.extract_strided_slice %301 {offsets = [0, 96], sizes = [2, 32], strides = [1, 1]} : vector<2x128xf32> to vector<2x32xf32>
    %309 = math.tanh %308 : vector<2x32xf32>
    %310 = vector.extract_strided_slice %307 {offsets = [0, 0], sizes = [2, 32], strides = [1, 1]} : vector<2x96xf32> to vector<2x32xf32>
    %311 = vector.extract_strided_slice %307 {offsets = [0, 32], sizes = [2, 32], strides = [1, 1]} : vector<2x96xf32> to vector<2x32xf32>
    %312 = vector.extract_strided_slice %307 {offsets = [0, 64], sizes = [2, 32], strides = [1, 1]} : vector<2x96xf32> to vector<2x32xf32>
    %313 = arith.mulf %311, %290 : vector<2x32xf32>
    %314 = arith.mulf %310, %309 : vector<2x32xf32>
    %315 = arith.addf %313, %314 : vector<2x32xf32>
    %316 = math.tanh %315 : vector<2x32xf32>
    %317 = arith.mulf %312, %316 : vector<2x32xf32>
    %318 = arith.index_cast %c5_i32_71 : i32 to index
    %c0_76 = arith.constant 0 : index
    %c0_77 = arith.constant 0 : index
    %319 = vector.load %arg5[%318, %c0_76, %c0_77] : memref<7x2x32xf32, #tpu.memory_space<vmem>>, vector<1x2x32xf32>
    %320 = vector.shape_cast %319 : vector<1x2x32xf32> to vector<2x32xf32>
    %321 = vector.shape_cast %317 : vector<2x32xf32> to vector<1x2x32xf32>
    tpu.vector_store %arg5[%318, %c0_76, %c0_77], %321 {strides = array<i32>} : memref<7x2x32xf32, #tpu.memory_space<vmem>>, vector<1x2x32xf32>,
    %c6_i32_78 = arith.constant 6 : i32
    %322 = arith.index_cast %c6_i32_78 : i32 to index
    %c0_79 = arith.constant 0 : index
    %c0_80 = arith.constant 0 : index
    %323 = vector.load %arg3[%322, %c0_79, %c0_80] : memref<7x2x128xf32, #tpu.memory_space<vmem>>, vector<1x2x128xf32>
    %324 = vector.shape_cast %323 : vector<1x2x128xf32> to vector<2x128xf32>
    %cst_81 = arith.constant dense<0.000000e+00> : vector<2x128xf32>
    %325 = tpu.matmul %317, %1, %cst_81 {dimension_numbers = #tpu.dot_dimension_numbers<[1], [0], [0], [1], [0, 0, 1, 1], [], []>} : vector<2x32xf32>, vector<32x128xf32>, vector<2x128xf32> -> vector<2x128xf32>
    %326 = arith.addf %324, %325 : vector<2x128xf32>
    %327 = vector.extract_strided_slice %326 {offsets = [0, 0], sizes = [2, 96], strides = [1, 1]} : vector<2x128xf32> to vector<2x96xf32>
    %328 = arith.negf %327 : vector<2x96xf32>
    %329 = math.exp %328 : vector<2x96xf32>
    %cst_82 = arith.constant 1.000000e+00 : f32
    %330 = vector.broadcast %cst_82 : f32 to vector<2x96xf32>
    %331 = arith.addf %330, %329 : vector<2x96xf32>
    %332 = arith.divf %330, %331 : vector<2x96xf32>
    %333 = vector.extract_strided_slice %326 {offsets = [0, 96], sizes = [2, 32], strides = [1, 1]} : vector<2x128xf32> to vector<2x32xf32>
    %334 = math.tanh %333 : vector<2x32xf32>
    %335 = vector.extract_strided_slice %332 {offsets = [0, 0], sizes = [2, 32], strides = [1, 1]} : vector<2x96xf32> to vector<2x32xf32>
    %336 = vector.extract_strided_slice %332 {offsets = [0, 32], sizes = [2, 32], strides = [1, 1]} : vector<2x96xf32> to vector<2x32xf32>
    %337 = vector.extract_strided_slice %332 {offsets = [0, 64], sizes = [2, 32], strides = [1, 1]} : vector<2x96xf32> to vector<2x32xf32>
    %338 = arith.mulf %336, %315 : vector<2x32xf32>
    %339 = arith.mulf %335, %334 : vector<2x32xf32>
    %340 = arith.addf %338, %339 : vector<2x32xf32>
    %341 = math.tanh %340 : vector<2x32xf32>
    %342 = arith.mulf %337, %341 : vector<2x32xf32>
    %343 = arith.index_cast %c6_i32_78 : i32 to index
    %c0_83 = arith.constant 0 : index
    %c0_84 = arith.constant 0 : index
    %344 = vector.load %arg5[%343, %c0_83, %c0_84] : memref<7x2x32xf32, #tpu.memory_space<vmem>>, vector<1x2x32xf32>
    %345 = vector.shape_cast %344 : vector<1x2x32xf32> to vector<2x32xf32>
    %346 = vector.shape_cast %342 : vector<2x32xf32> to vector<1x2x32xf32>
    tpu.vector_store %arg5[%343, %c0_83, %c0_84], %346 {strides = array<i32>} : memref<7x2x32xf32, #tpu.memory_space<vmem>>, vector<1x2x32xf32>,
    %c7_i32_85 = arith.constant 7 : i32
    return
  }
  func.func @transform_0(%arg0: i32) -> (i32, i32, i32) {
    %c0_i32 = arith.constant 0 : i32
    %c0_i32_0 = arith.constant 0 : i32
    %c0_i32_1 = arith.constant 0 : i32
    %c0_i32_2 = arith.constant 0 : i32
    return %c0_i32, %c0_i32_0, %c0_i32_1 : i32, i32, i32
  }
  func.func @transform_1(%arg0: i32) -> (i32, i32) {
    %c0_i32 = arith.constant 0 : i32
    %c0_i32_0 = arith.constant 0 : i32
    %c0_i32_1 = arith.constant 0 : i32
    return %c0_i32, %c0_i32_0 : i32, i32
  }
  func.func @transform_2(%arg0: i32) -> (i32, i32, i32) {
    %c0_i32 = arith.constant 0 : i32
    %c0_i32_0 = arith.constant 0 : i32
    %c0_i32_1 = arith.constant 0 : i32
    %c0_i32_2 = arith.constant 0 : i32
    return %c0_i32, %c0_i32_0, %c0_i32_1 : i32, i32, i32
  }
  func.func @transform_3(%arg0: i32) -> (i32, i32) {
    %c0_i32 = arith.constant 0 : i32
    %c0_i32_0 = arith.constant 0 : i32
    %c0_i32_1 = arith.constant 0 : i32
    return %c0_i32, %c0_i32_0 : i32, i32
  }
  func.func @transform_4(%arg0: i32) -> (i32, i32, i32) {
    %c0_i32 = arith.constant 0 : i32
    %c0_i32_0 = arith.constant 0 : i32
    %c0_i32_1 = arith.constant 0 : i32
    %c0_i32_2 = arith.constant 0 : i32
    return %c0_i32, %c0_i32_0, %c0_i32_1 : i32, i32, i32
  }
}

</mosaic_0001>

<llo_original>
// kernel: seq2seq_forward.5
$region0: #{seq2seq_forward.5}
  #allocation0 [shape = 'u32[]', space=smem, size = 0x4, offset = 0x4, fixed_abs, tag = 'smem constant byte address 0x4 - core index']
  #allocation1 [shape = 'u32[72,128]{1,0:T(1,128)}', space=vmem, size = 0x9000, scoped, tag = 'internal scratch']
  %s0 = inlined_call_operand.vmem [shape: f32[14,32], index: 0, kind: input, shape index: {}]
  %s1 = inlined_call_operand.vmem [shape: f32[32,128], index: 1, kind: input, shape index: {}]
  %s2 = inlined_call_operand.vmem [shape: f32[1,128], index: 2, kind: input, shape index: {}]
  %s3 = inlined_call_operand.vmem [shape: f32[14,128], index: 3, kind: output, shape index: {}]
  %s4 = sld [smem:[#allocation0]]
  $region22: #{seq2seq_forward.5} parent=0
    _
  %s6 = ssub.s32 1, %s4
  %s7 = scalar_select 0, %s6, %s4
  // Predicated region
  $region2: #{seq2seq_forward.5} parent=0 // pred_check
    _
  $region3: #{seq2seq_forward.5} parent=0 // pred_check_branch
    %9 = sbr.rel (0) target = $region5
  $region4: #{seq2seq_forward.5} parent=0 // pred_region
    _
  $region5: #{seq2seq_forward.5} parent=0 // pred_fallthru
    _
  // Predicated region
  $region6: #{seq2seq_forward.5} parent=0 // pred_check
    _
  $region7: #{seq2seq_forward.5} parent=0 // pred_check_branch
    %11 = sbr.rel (0) target = $region9
  $region8: #{seq2seq_forward.5} parent=0 // pred_region
    _
  $region9: #{seq2seq_forward.5} parent=0 // pred_fallthru
    _
  // Predicated region
  $region10: #{seq2seq_forward.5} parent=0 // pred_check
    _
  $region11: #{seq2seq_forward.5} parent=0 // pred_check_branch
    %13 = sbr.rel (0) target = $region13
  $region12: #{seq2seq_forward.5} parent=0 // pred_region
    _
  $region13: #{seq2seq_forward.5} parent=0 // pred_fallthru
    _
  %v14 = vld [vmem:[%s0] sm:$0xff]
  %v15 = vld [vmem:[%s0 + $0x8] sm:$0x3f]
  %v16 = vld [vmem:[%s1] sm:$0xff]
  %v17 = vld [vmem:[%s1 + $0x8] sm:$0xff]
  %v18 = vld [vmem:[%s1 + $0x10] sm:$0xff]
  %v19 = vld [vmem:[%s1 + $0x18] sm:$0xff]
  %v20 = vld [vmem:[%s2] sm:$0x1]
  %v22 = vperm.slane %v20, 0
  %vm24 = vcmask 261120
  %v26 = vsel %vm24, %v14, 0
  %v29 = vsel %vm24, %v15, 0
  %31 = vmatpush.msra.mxu0 0.0
  %32 = vmatpush.msra.mxu0 0.0
  %33 = vmatpush.msra.mxu0 0.0
  %34 = vmatpush.msra.mxu0 0.0
  %35 = vmatpush.msra.mxu0 0.0
  %36 = vmatpush.msra.mxu0 0.0
  %37 = vmatpush.msra.mxu0 0.0
  %38 = vmatpush.msra.mxu0 0.0
  %39 = vmatpush.msra.mxu0 0.0
  %40 = vmatpush.msra.mxu0 0.0
  %41 = vmatpush.msra.mxu0 0.0
  %42 = vmatpush.msra.mxu0 0.0
  %43 = vmatpush.msra.mxu0 %v19
  %44 = vmatpush.msra.mxu0 %v18
  %45 = vmatpush.msra.mxu0 %v17
  %46 = vmatpush.msra.mxu0 %v16
  %47 = vmatmul.f32.gmra.mxu0 %v26
  %v48 = vpop.f32.mrf.mxu0
  %v49 = vadd.f32 %v22, %v48
  %50 = vmatmul.f32.gmra.mxu0 %v29
  %v51 = vpop.f32.mrf.mxu0
  %v52 = vadd.f32 %v22, %v51
  %53 = vdwg.mxu0
  %54 = vst [vmem:[%s3] sm:$0xff] %v49
  %55 = vst [vmem:[%s3 + $0x8] sm:$0x3f] %v52
  // Predicated region
  $region14: #{seq2seq_forward.5} parent=0 // pred_check
    _
  $region15: #{seq2seq_forward.5} parent=0 // pred_check_branch
    %57 = sbr.rel (0) target = $region17
  $region16: #{seq2seq_forward.5} parent=0 // pred_region
    _
  $region17: #{seq2seq_forward.5} parent=0 // pred_fallthru
    _
  // Predicated region
  $region18: #{seq2seq_forward.5} parent=0 // pred_check
    _
  $region19: #{seq2seq_forward.5} parent=0 // pred_check_branch
    %59 = sbr.rel (0) target = $region21
  $region20: #{seq2seq_forward.5} parent=0 // pred_region
    _
  $region21: #{seq2seq_forward.5} parent=0 // pred_fallthru
    _

// kernel: seq2seq_forward.4
$region0: #{seq2seq_forward.4}
  #allocation0 [shape = 'u32[]', space=smem, size = 0x4, offset = 0x4, fixed_abs, tag = 'smem constant byte address 0x4 - core index']
  #allocation1 [shape = 'u32[72,128]{1,0:T(1,128)}', space=vmem, size = 0x9000, scoped, tag = 'internal scratch']
  %s0 = inlined_call_operand.vmem [shape: f32[16,32], index: 0, kind: input, shape index: {}]
  %s1 = inlined_call_operand.vmem [shape: f32[32,128], index: 1, kind: input, shape index: {}]
  %s2 = inlined_call_operand.vmem [shape: f32[1,128], index: 2, kind: input, shape index: {}]
  %s3 = inlined_call_operand.vmem [shape: f32[16,128], index: 3, kind: output, shape index: {}]
  %s4 = sld [smem:[#allocation0]]
  $region22: #{seq2seq_forward.4} parent=0
    _
  %s6 = ssub.s32 1, %s4
  %s7 = scalar_select 0, %s6, %s4
  // Predicated region
  $region2: #{seq2seq_forward.4} parent=0 // pred_check
    _
  $region3: #{seq2seq_forward.4} parent=0 // pred_check_branch
    %9 = sbr.rel (0) target = $region5
  $region4: #{seq2seq_forward.4} parent=0 // pred_region
    _
  $region5: #{seq2seq_forward.4} parent=0 // pred_fallthru
    _
  // Predicated region
  $region6: #{seq2seq_forward.4} parent=0 // pred_check
    _
  $region7: #{seq2seq_forward.4} parent=0 // pred_check_branch
    %11 = sbr.rel (0) target = $region9
  $region8: #{seq2seq_forward.4} parent=0 // pred_region
    _
  $region9: #{seq2seq_forward.4} parent=0 // pred_fallthru
    _
  // Predicated region
  $region10: #{seq2seq_forward.4} parent=0 // pred_check
    _
  $region11: #{seq2seq_forward.4} parent=0 // pred_check_branch
    %13 = sbr.rel (0) target = $region13
  $region12: #{seq2seq_forward.4} parent=0 // pred_region
    _
  $region13: #{seq2seq_forward.4} parent=0 // pred_fallthru
    _
  %v14 = vld [vmem:[%s0] sm:$0xff]
  %v15 = vld [vmem:[%s0 + $0x8] sm:$0xff]
  %v16 = vld [vmem:[%s1] sm:$0xff]
  %v17 = vld [vmem:[%s1 + $0x8] sm:$0xff]
  %v18 = vld [vmem:[%s1 + $0x10] sm:$0xff]
  %v19 = vld [vmem:[%s1 + $0x18] sm:$0xff]
  %v20 = vld [vmem:[%s2] sm:$0x1]
  %v22 = vperm.slane %v20, 0
  %vm24 = vcmask 261120
  %v26 = vsel %vm24, %v14, 0
  %v29 = vsel %vm24, %v15, 0
  %31 = vmatpush.msra.mxu0 0.0
  %32 = vmatpush.msra.mxu0 0.0
  %33 = vmatpush.msra.mxu0 0.0
  %34 = vmatpush.msra.mxu0 0.0
  %35 = vmatpush.msra.mxu0 0.0
  %36 = vmatpush.msra.mxu0 0.0
  %37 = vmatpush.msra.mxu0 0.0
  %38 = vmatpush.msra.mxu0 0.0
  %39 = vmatpush.msra.mxu0 0.0
  %40 = vmatpush.msra.mxu0 0.0
  %41 = vmatpush.msra.mxu0 0.0
  %42 = vmatpush.msra.mxu0 0.0
  %43 = vmatpush.msra.mxu0 %v19
  %44 = vmatpush.msra.mxu0 %v18
  %45 = vmatpush.msra.mxu0 %v17
  %46 = vmatpush.msra.mxu0 %v16
  %47 = vmatmul.f32.gmra.mxu0 %v26
  %v48 = vpop.f32.mrf.mxu0
  %v49 = vadd.f32 %v22, %v48
  %50 = vmatmul.f32.gmra.mxu0 %v29
  %v51 = vpop.f32.mrf.mxu0
  %v52 = vadd.f32 %v22, %v51
  %53 = vdwg.mxu0
  %54 = vst [vmem:[%s3] sm:$0xff] %v49
  %55 = vst [vmem:[%s3 + $0x8] sm:$0xff] %v52
  // Predicated region
  $region14: #{seq2seq_forward.4} parent=0 // pred_check
    _
  $region15: #{seq2seq_forward.4} parent=0 // pred_check_branch
    %57 = sbr.rel (0) target = $region17
  $region16: #{seq2seq_forward.4} parent=0 // pred_region
    _
  $region17: #{seq2seq_forward.4} parent=0 // pred_fallthru
    _
  // Predicated region
  $region18: #{seq2seq_forward.4} parent=0 // pred_check
    _
  $region19: #{seq2seq_forward.4} parent=0 // pred_check_branch
    %59 = sbr.rel (0) target = $region21
  $region20: #{seq2seq_forward.4} parent=0 // pred_region
    _
  $region21: #{seq2seq_forward.4} parent=0 // pred_fallthru
    _

// kernel: seq2seq_forward.6
$region0: #{seq2seq_forward.6}
  #allocation0 [shape = 'u32[]', space=smem, size = 0x4, offset = 0x4, fixed_abs, tag = 'smem constant byte address 0x4 - core index']
  #allocation1 [shape = 'u32[72,128]{1,0:T(1,128)}', space=vmem, size = 0x9000, scoped, tag = 'internal scratch']
  %s0 = inlined_call_operand.vmem [shape: f32[8,2,128], index: 0, kind: input, shape index: {}]
  %s1 = inlined_call_operand.vmem [shape: f32[32,128], index: 1, kind: input, shape index: {}]
  %s2 = inlined_call_operand.vmem [shape: f32[7,2,128], index: 2, kind: input, shape index: {}]
  %s3 = inlined_call_operand.vmem [shape: f32[32,128], index: 3, kind: input, shape index: {}]
  %s4 = inlined_call_operand.vmem [shape: f32[7,2,32], index: 4, kind: output, shape index: {}]
  %s5 = sld [smem:[#allocation0]]
  $region26: #{seq2seq_forward.6} parent=0
    _
  %s7 = ssub.s32 1, %s5
  %s8 = scalar_select 0, %s7, %s5
  // Predicated region
  $region2: #{seq2seq_forward.6} parent=0 // pred_check
    _
  $region3: #{seq2seq_forward.6} parent=0 // pred_check_branch
    %10 = sbr.rel (0) target = $region5
  $region4: #{seq2seq_forward.6} parent=0 // pred_region
    _
  $region5: #{seq2seq_forward.6} parent=0 // pred_fallthru
    _
  // Predicated region
  $region6: #{seq2seq_forward.6} parent=0 // pred_check
    _
  $region7: #{seq2seq_forward.6} parent=0 // pred_check_branch
    %12 = sbr.rel (0) target = $region9
  $region8: #{seq2seq_forward.6} parent=0 // pred_region
    _
  $region9: #{seq2seq_forward.6} parent=0 // pred_fallthru
    _
  // Predicated region
  $region10: #{seq2seq_forward.6} parent=0 // pred_check
    _
  $region11: #{seq2seq_forward.6} parent=0 // pred_check_branch
    %14 = sbr.rel (0) target = $region13
  $region12: #{seq2seq_forward.6} parent=0 // pred_region
    _
  $region13: #{seq2seq_forward.6} parent=0 // pred_fallthru
    _
  // Predicated region
  $region14: #{seq2seq_forward.6} parent=0 // pred_check
    _
  $region15: #{seq2seq_forward.6} parent=0 // pred_check_branch
    %16 = sbr.rel (0) target = $region17
  $region16: #{seq2seq_forward.6} parent=0 // pred_region
    _
  $region17: #{seq2seq_forward.6} parent=0 // pred_fallthru
    _
  %v17 = vld [vmem:[%s1] sm:$0xff]
  %v18 = vld [vmem:[%s1 + $0x8] sm:$0xff]
  %v19 = vld [vmem:[%s1 + $0x10] sm:$0xff]
  %v20 = vld [vmem:[%s1 + $0x18] sm:$0xff]
  %v21 = vld [vmem:[%s3] sm:$0xff]
  %v22 = vld [vmem:[%s3 + $0x8] sm:$0xff]
  %v23 = vld [vmem:[%s3 + $0x10] sm:$0xff]
  %v24 = vld [vmem:[%s3 + $0x18] sm:$0xff]
  %v25 = vld [vmem:[%s0] sm:$0x3]
  %vm26 = vcmask 261120
  %v28 = vsel %vm26, 0.0, 0
  %30 = vmatpush.msra.mxu0 0.0
  %31 = vmatpush.msra.mxu0 0.0
  %32 = vmatpush.msra.mxu0 0.0
  %33 = vmatpush.msra.mxu0 0.0
  %34 = vmatpush.msra.mxu0 0.0
  %35 = vmatpush.msra.mxu0 0.0
  %36 = vmatpush.msra.mxu0 0.0
  %37 = vmatpush.msra.mxu0 0.0
  %38 = vmatpush.msra.mxu0 0.0
  %39 = vmatpush.msra.mxu0 0.0
  %40 = vmatpush.msra.mxu0 0.0
  %41 = vmatpush.msra.mxu0 0.0
  %42 = vmatpush.msra.mxu0 %v20
  %43 = vmatpush.msra.mxu0 %v19
  %44 = vmatpush.msra.mxu0 %v18
  %45 = vmatpush.msra.mxu0 %v17
  %46 = vmatmul.f32.gmra.mxu0 %v28
  %v47 = vpop.f32.mrf.mxu0
  %v48 = vadd.f32 0.0, %v47
  %49 = vdwg.mxu0
  %v50 = vadd.f32 %v25, %v48
  %v51 = vxor.u32 %v50, 2147483648
  %v52 = vmul.f32 %v51, 1.442695
  %v53 = vpow.pop %v52
  %v54 = vadd.f32 %v53, 1.0
  %v55 = vrcp.pop %v54
  %v56 = vmul.f32 %v54, %v55
  %v57 = vsub.f32 1.0, %v56
  %v58 = vmul.f32 %v55, %v57
  %v59 = vadd.f32 %v55, %v58
  %vm60 = vweird.f32 %v54
  %vm61 = vweird.f32 %v55
  %vm62 = vmor %vm60, %vm61
  %v63 = vsel %vm62, %v55, %v59
  %v64 = vand.u32 2147483647, %v54
  %vm65 = vcmp.eq.f32.partialorder %v64, 8.507059e+37
  %v66 = vand.u32 %v54, 2147483648
  %v67 = vor.u32 1.1754944e-38, %v66
  %v68 = vsel %vm65, %v67, %v63
  %v69 = vmul.f32 1.0, %v68
  %v70 = vtanh.pop %v50
  %v71 = vmul.f32 %v69, 0.0
  %73 = vrot.lane.b32.xlu0 %v70, 32
  %v74 = vpop.permute.xlu0 %73
  %v76 = vmul.f32 %v69, %v74
  %78 = vrot.lane.b32.xlu0 %v76, 32
  %v79 = vpop.permute.xlu0 %78
  %v81 = vadd.f32 %v71, %v79
  %v82 = vtanh.pop %v81
  %84 = vrot.lane.b32.xlu0 %v82, 32
  %v85 = vpop.permute.xlu0 %84
  %v87 = vmul.f32 %v69, %v85
  %s88 = scalar_lea.vmem %s0, 2
  %v89 = vld [vmem:[%s88] sm:$0x3]
  %91 = vrot.lane.b32.xlu0 %v87, 64
  %v92 = vpop.permute.xlu0 %91
  %v93 = vsel %vm26, %v92, 0
  %95 = vmatpush.msra.mxu0 0.0
  %96 = vmatpush.msra.mxu0 0.0
  %97 = vmatpush.msra.mxu0 0.0
  %98 = vmatpush.msra.mxu0 0.0
  %99 = vmatpush.msra.mxu0 0.0
  %100 = vmatpush.msra.mxu0 0.0
  %101 = vmatpush.msra.mxu0 0.0
  %102 = vmatpush.msra.mxu0 0.0
  %103 = vmatpush.msra.mxu0 0.0
  %104 = vmatpush.msra.mxu0 0.0
  %105 = vmatpush.msra.mxu0 0.0
  %106 = vmatpush.msra.mxu0 0.0
  %107 = vmatpush.msra.mxu0 %v20
  %108 = vmatpush.msra.mxu0 %v19
  %109 = vmatpush.msra.mxu0 %v18
  %110 = vmatpush.msra.mxu0 %v17
  %111 = vmatmul.f32.gmra.mxu0 %v93
  %v112 = vpop.f32.mrf.mxu0
  %v113 = vadd.f32 0.0, %v112
  %114 = vdwg.mxu0
  %v115 = vadd.f32 %v89, %v113
  %v116 = vxor.u32 %v115, 2147483648
  %v117 = vmul.f32 %v116, 1.442695
  %v118 = vpow.pop %v117
  %v119 = vadd.f32 %v118, 1.0
  %v120 = vrcp.pop %v119
  %v121 = vmul.f32 %v119, %v120
  %v122 = vsub.f32 1.0, %v121
  %v123 = vmul.f32 %v120, %v122
  %v124 = vadd.f32 %v120, %v123
  %vm125 = vweird.f32 %v119
  %vm126 = vweird.f32 %v120
  %vm127 = vmor %vm125, %vm126
  %v128 = vsel %vm127, %v120, %v124
  %v129 = vand.u32 2147483647, %v119
  %vm130 = vcmp.eq.f32.partialorder %v129, 8.507059e+37
  %v131 = vand.u32 %v119, 2147483648
  %v132 = vor.u32 1.1754944e-38, %v131
  %v133 = vsel %vm130, %v132, %v128
  %v134 = vmul.f32 1.0, %v133
  %v135 = vtanh.pop %v115
  %v136 = vmul.f32 %v134, %v81
  %138 = vrot.lane.b32.xlu0 %v135, 32
  %v139 = vpop.permute.xlu0 %138
  %v141 = vmul.f32 %v134, %v139
  %143 = vrot.lane.b32.xlu0 %v141, 32
  %v144 = vpop.permute.xlu0 %143
  %v146 = vadd.f32 %v136, %v144
  %v147 = vtanh.pop %v146
  %149 = vrot.lane.b32.xlu0 %v147, 32
  %v150 = vpop.permute.xlu0 %149
  %v152 = vmul.f32 %v134, %v150
  %s153 = scalar_lea.vmem %s0, 4
  %v154 = vld [vmem:[%s153] sm:$0x3]
  %156 = vrot.lane.b32.xlu0 %v152, 64
  %v157 = vpop.permute.xlu0 %156
  %v158 = vsel %vm26, %v157, 0
  %160 = vmatpush.msra.mxu0 0.0
  %161 = vmatpush.msra.mxu0 0.0
  %162 = vmatpush.msra.mxu0 0.0
  %163 = vmatpush.msra.mxu0 0.0
  %164 = vmatpush.msra.mxu0 0.0
  %165 = vmatpush.msra.mxu0 0.0
  %166 = vmatpush.msra.mxu0 0.0
  %167 = vmatpush.msra.mxu0 0.0
  %168 = vmatpush.msra.mxu0 0.0
  %169 = vmatpush.msra.mxu0 0.0
  %170 = vmatpush.msra.mxu0 0.0
  %171 = vmatpush.msra.mxu0 0.0
  %172 = vmatpush.msra.mxu0 %v20
  %173 = vmatpush.msra.mxu0 %v19
  %174 = vmatpush.msra.mxu0 %v18
  %175 = vmatpush.msra.mxu0 %v17
  %176 = vmatmul.f32.gmra.mxu0 %v158
  %v177 = vpop.f32.mrf.mxu0
  %v178 = vadd.f32 0.0, %v177
  %179 = vdwg.mxu0
  %v180 = vadd.f32 %v154, %v178
  %v181 = vxor.u32 %v180, 2147483648
  %v182 = vmul.f32 %v181, 1.442695
  %v183 = vpow.pop %v182
  %v184 = vadd.f32 %v183, 1.0
  %v185 = vrcp.pop %v184
  %v186 = vmul.f32 %v184, %v185
  %v187 = vsub.f32 1.0, %v186
  %v188 = vmul.f32 %v185, %v187
  %v189 = vadd.f32 %v185, %v188
  %vm190 = vweird.f32 %v184
  %vm191 = vweird.f32 %v185
  %vm192 = vmor %vm190, %vm191
  %v193 = vsel %vm192, %v185, %v189
  %v194 = vand.u32 2147483647, %v184
  %vm195 = vcmp.eq.f32.partialorder %v194, 8.507059e+37
  %v196 = vand.u32 %v184, 2147483648
  %v197 = vor.u32 1.1754944e-38, %v196
  %v198 = vsel %vm195, %v197, %v193
  %v199 = vmul.f32 1.0, %v198
  %v200 = vtanh.pop %v180
  %v201 = vmul.f32 %v199, %v146
  %203 = vrot.lane.b32.xlu0 %v200, 32
  %v204 = vpop.permute.xlu0 %203
  %v206 = vmul.f32 %v199, %v204
  %208 = vrot.lane.b32.xlu0 %v206, 32
  %v209 = vpop.permute.xlu0 %208
  %v211 = vadd.f32 %v201, %v209
  %v212 = vtanh.pop %v211
  %214 = vrot.lane.b32.xlu0 %v212, 32
  %v215 = vpop.permute.xlu0 %214
  %v217 = vmul.f32 %v199, %v215
  %s218 = scalar_lea.vmem %s0, 6
  %v219 = vld [vmem:[%s218] sm:$0x3]
  %221 = vrot.lane.b32.xlu0 %v217, 64
  %v222 = vpop.permute.xlu0 %221
  %v223 = vsel %vm26, %v222, 0
  %225 = vmatpush.msra.mxu0 0.0
  %226 = vmatpush.msra.mxu0 0.0
  %227 = vmatpush.msra.mxu0 0.0
  %228 = vmatpush.msra.mxu0 0.0
  %229 = vmatpush.msra.mxu0 0.0
  %230 = vmatpush.msra.mxu0 0.0
  %231 = vmatpush.msra.mxu0 0.0
  %232 = vmatpush.msra.mxu0 0.0
  %233 = vmatpush.msra.mxu0 0.0
  %234 = vmatpush.msra.mxu0 0.0
  %235 = vmatpush.msra.mxu0 0.0
  %236 = vmatpush.msra.mxu0 0.0
  %237 = vmatpush.msra.mxu0 %v20
  %238 = vmatpush.msra.mxu0 %v19
  %239 = vmatpush.msra.mxu0 %v18
  %240 = vmatpush.msra.mxu0 %v17
  %241 = vmatmul.f32.gmra.mxu0 %v223
  %v242 = vpop.f32.mrf.mxu0
  %v243 = vadd.f32 0.0, %v242
  %244 = vdwg.mxu0
  %v245 = vadd.f32 %v219, %v243
  %v246 = vxor.u32 %v245, 2147483648
  %v247 = vmul.f32 %v246, 1.442695
  %v248 = vpow.pop %v247
  %v249 = vadd.f32 %v248, 1.0
  %v250 = vrcp.pop %v249
  %v251 = vmul.f32 %v249, %v250
  %v252 = vsub.f32 1.0, %v251
  %v253 = vmul.f32 %v250, %v252
  %v254 = vadd.f32 %v250, %v253
  %vm255 = vweird.f32 %v249
  %vm256 = vweird.f32 %v250
  %vm257 = vmor %vm255, %vm256
  %v258 = vsel %vm257, %v250, %v254
  %v259 = vand.u32 2147483647, %v249
  %vm260 = vcmp.eq.f32.partialorder %v259, 8.507059e+37
  %v261 = vand.u32 %v249, 2147483648
  %v262 = vor.u32 1.1754944e-38, %v261
  %v263 = vsel %vm260, %v262, %v258
  %v264 = vmul.f32 1.0, %v263
  %v265 = vtanh.pop %v245
  %v266 = vmul.f32 %v264, %v211
  %268 = vrot.lane.b32.xlu0 %v265, 32
  %v269 = vpop.permute.xlu0 %268
  %v271 = vmul.f32 %v264, %v269
  %273 = vrot.lane.b32.xlu0 %v271, 32
  %v274 = vpop.permute.xlu0 %273
  %v276 = vadd.f32 %v266, %v274
  %v277 = vtanh.pop %v276
  %279 = vrot.lane.b32.xlu0 %v277, 32
  %v280 = vpop.permute.xlu0 %279
  %v282 = vmul.f32 %v264, %v280
  %s283 = scalar_lea.vmem %s0, 8
  %v284 = vld [vmem:[%s283] sm:$0x3]
  %286 = vrot.lane.b32.xlu0 %v282, 64
  %v287 = vpop.permute.xlu0 %286
  %v288 = vsel %vm26, %v287, 0
  %290 = vmatpush.msra.mxu0 0.0
  %291 = vmatpush.msra.mxu0 0.0
  %292 = vmatpush.msra.mxu0 0.0
  %293 = vmatpush.msra.mxu0 0.0
  %294 = vmatpush.msra.mxu0 0.0
  %295 = vmatpush.msra.mxu0 0.0
  %296 = vmatpush.msra.mxu0 0.0
  %297 = vmatpush.msra.mxu0 0.0
  %298 = vmatpush.msra.mxu0 0.0
  %299 = vmatpush.msra.mxu0 0.0
  %300 = vmatpush.msra.mxu0 0.0
  %301 = vmatpush.msra.mxu0 0.0
  %302 = vmatpush.msra.mxu0 %v20
  %303 = vmatpush.msra.mxu0 %v19
  %304 = vmatpush.msra.mxu0 %v18
  %305 = vmatpush.msra.mxu0 %v17
  %306 = vmatmul.f32.gmra.mxu0 %v288
  %v307 = vpop.f32.mrf.mxu0
  %v308 = vadd.f32 0.0, %v307
  %309 = vdwg.mxu0
  %v310 = vadd.f32 %v284, %v308
  %v311 = vxor.u32 %v310, 2147483648
  %v312 = vmul.f32 %v311, 1.442695
  %v313 = vpow.pop %v312
  %v314 = vadd.f32 %v313, 1.0
  %v315 = vrcp.pop %v314
  %v316 = vmul.f32 %v314, %v315
  %v317 = vsub.f32 1.0, %v316
  %v318 = vmul.f32 %v315, %v317
  %v319 = vadd.f32 %v315, %v318
  %vm320 = vweird.f32 %v314
  %vm321 = vweird.f32 %v315
  %vm322 = vmor %vm320, %vm321
  %v323 = vsel %vm322, %v315, %v319
  %v324 = vand.u32 2147483647, %v314
  %vm325 = vcmp.eq.f32.partialorder %v324, 8.507059e+37
  %v326 = vand.u32 %v314, 2147483648
  %v327 = vor.u32 1.1754944e-38, %v326
  %v328 = vsel %vm325, %v327, %v323
  %v329 = vmul.f32 1.0, %v328
  %v330 = vtanh.pop %v310
  %v331 = vmul.f32 %v329, %v276
  %333 = vrot.lane.b32.xlu0 %v330, 32
  %v334 = vpop.permute.xlu0 %333
  %v336 = vmul.f32 %v329, %v334
  %338 = vrot.lane.b32.xlu0 %v336, 32
  %v339 = vpop.permute.xlu0 %338
  %v341 = vadd.f32 %v331, %v339
  %v342 = vtanh.pop %v341
  %344 = vrot.lane.b32.xlu0 %v342, 32
  %v345 = vpop.permute.xlu0 %344
  %v347 = vmul.f32 %v329, %v345
  %s348 = scalar_lea.vmem %s0, 10
  %v349 = vld [vmem:[%s348] sm:$0x3]
  %351 = vrot.lane.b32.xlu0 %v347, 64
  %v352 = vpop.permute.xlu0 %351
  %v353 = vsel %vm26, %v352, 0
  %355 = vmatpush.msra.mxu0 0.0
  %356 = vmatpush.msra.mxu0 0.0
  %357 = vmatpush.msra.mxu0 0.0
  %358 = vmatpush.msra.mxu0 0.0
  %359 = vmatpush.msra.mxu0 0.0
  %360 = vmatpush.msra.mxu0 0.0
  %361 = vmatpush.msra.mxu0 0.0
  %362 = vmatpush.msra.mxu0 0.0
  %363 = vmatpush.msra.mxu0 0.0
  %364 = vmatpush.msra.mxu0 0.0
  %365 = vmatpush.msra.mxu0 0.0
  %366 = vmatpush.msra.mxu0 0.0
  %367 = vmatpush.msra.mxu0 %v20
  %368 = vmatpush.msra.mxu0 %v19
  %369 = vmatpush.msra.mxu0 %v18
  %370 = vmatpush.msra.mxu0 %v17
  %371 = vmatmul.f32.gmra.mxu0 %v353
  %v372 = vpop.f32.mrf.mxu0
  %v373 = vadd.f32 0.0, %v372
  %374 = vdwg.mxu0
  %v375 = vadd.f32 %v349, %v373
  %v376 = vxor.u32 %v375, 2147483648
  %v377 = vmul.f32 %v376, 1.442695
  %v378 = vpow.pop %v377
  %v379 = vadd.f32 %v378, 1.0
  %v380 = vrcp.pop %v379
  %v381 = vmul.f32 %v379, %v380
  %v382 = vsub.f32 1.0, %v381
  %v383 = vmul.f32 %v380, %v382
  %v384 = vadd.f32 %v380, %v383
  %vm385 = vweird.f32 %v379
  %vm386 = vweird.f32 %v380
  %vm387 = vmor %vm385, %vm386
  %v388 = vsel %vm387, %v380, %v384
  %v389 = vand.u32 2147483647, %v379
  %vm390 = vcmp.eq.f32.partialorder %v389, 8.507059e+37
  %v391 = vand.u32 %v379, 2147483648
  %v392 = vor.u32 1.1754944e-38, %v391
  %v393 = vsel %vm390, %v392, %v388
  %v394 = vmul.f32 1.0, %v393
  %v395 = vtanh.pop %v375
  %v396 = vmul.f32 %v394, %v341
  %398 = vrot.lane.b32.xlu0 %v395, 32
  %v399 = vpop.permute.xlu0 %398
  %v401 = vmul.f32 %v394, %v399
  %403 = vrot.lane.b32.xlu0 %v401, 32
  %v404 = vpop.permute.xlu0 %403
  %v406 = vadd.f32 %v396, %v404
  %v407 = vtanh.pop %v406
  %409 = vrot.lane.b32.xlu0 %v407, 32
  %v410 = vpop.permute.xlu0 %409
  %v412 = vmul.f32 %v394, %v410
  %s413 = scalar_lea.vmem %s0, 12
  %v414 = vld [vmem:[%s413] sm:$0x3]
  %416 = vrot.lane.b32.xlu0 %v412, 64
  %v417 = vpop.permute.xlu0 %416
  %v418 = vsel %vm26, %v417, 0
  %420 = vmatpush.msra.mxu0 0.0
  %421 = vmatpush.msra.mxu0 0.0
  %422 = vmatpush.msra.mxu0 0.0
  %423 = vmatpush.msra.mxu0 0.0
  %424 = vmatpush.msra.mxu0 0.0
  %425 = vmatpush.msra.mxu0 0.0
  %426 = vmatpush.msra.mxu0 0.0
  %427 = vmatpush.msra.mxu0 0.0
  %428 = vmatpush.msra.mxu0 0.0
  %429 = vmatpush.msra.mxu0 0.0
  %430 = vmatpush.msra.mxu0 0.0
  %431 = vmatpush.msra.mxu0 0.0
  %432 = vmatpush.msra.mxu0 %v20
  %433 = vmatpush.msra.mxu0 %v19
  %434 = vmatpush.msra.mxu0 %v18
  %435 = vmatpush.msra.mxu0 %v17
  %436 = vmatmul.f32.gmra.mxu0 %v418
  %v437 = vpop.f32.mrf.mxu0
  %v438 = vadd.f32 0.0, %v437
  %439 = vdwg.mxu0
  %v440 = vadd.f32 %v414, %v438
  %v441 = vxor.u32 %v440, 2147483648
  %v442 = vmul.f32 %v441, 1.442695
  %v443 = vpow.pop %v442
  %v444 = vadd.f32 %v443, 1.0
  %v445 = vrcp.pop %v444
  %v446 = vmul.f32 %v444, %v445
  %v447 = vsub.f32 1.0, %v446
  %v448 = vmul.f32 %v445, %v447
  %v449 = vadd.f32 %v445, %v448
  %vm450 = vweird.f32 %v444
  %vm451 = vweird.f32 %v445
  %vm452 = vmor %vm450, %vm451
  %v453 = vsel %vm452, %v445, %v449
  %v454 = vand.u32 2147483647, %v444
  %vm455 = vcmp.eq.f32.partialorder %v454, 8.507059e+37
  %v456 = vand.u32 %v444, 2147483648
  %v457 = vor.u32 1.1754944e-38, %v456
  %v458 = vsel %vm455, %v457, %v453
  %v459 = vmul.f32 1.0, %v458
  %v460 = vtanh.pop %v440
  %v461 = vmul.f32 %v459, %v406
  %463 = vrot.lane.b32.xlu0 %v460, 32
  %v464 = vpop.permute.xlu0 %463
  %v466 = vmul.f32 %v459, %v464
  %468 = vrot.lane.b32.xlu0 %v466, 32
  %v469 = vpop.permute.xlu0 %468
  %v471 = vadd.f32 %v461, %v469
  %v472 = vtanh.pop %v471
  %474 = vrot.lane.b32.xlu0 %v472, 32
  %v475 = vpop.permute.xlu0 %474
  %v477 = vmul.f32 %v459, %v475
  %s478 = scalar_lea.vmem %s0, 14
  %v479 = vld [vmem:[%s478] sm:$0x3]
  %481 = vrot.lane.b32.xlu0 %v477, 64
  %v482 = vpop.permute.xlu0 %481
  %v483 = vsel %vm26, %v482, 0
  %485 = vmatpush.msra.mxu0 0.0
  %486 = vmatpush.msra.mxu0 0.0
  %487 = vmatpush.msra.mxu0 0.0
  %488 = vmatpush.msra.mxu0 0.0
  %489 = vmatpush.msra.mxu0 0.0
  %490 = vmatpush.msra.mxu0 0.0
  %491 = vmatpush.msra.mxu0 0.0
  %492 = vmatpush.msra.mxu0 0.0
  %493 = vmatpush.msra.mxu0 0.0
  %494 = vmatpush.msra.mxu0 0.0
  %495 = vmatpush.msra.mxu0 0.0
  %496 = vmatpush.msra.mxu0 0.0
  %497 = vmatpush.msra.mxu0 %v20
  %498 = vmatpush.msra.mxu0 %v19
  %499 = vmatpush.msra.mxu0 %v18
  %500 = vmatpush.msra.mxu0 %v17
  %501 = vmatmul.f32.gmra.mxu0 %v483
  %v502 = vpop.f32.mrf.mxu0
  %v503 = vadd.f32 0.0, %v502
  %504 = vdwg.mxu0
  %v505 = vadd.f32 %v479, %v503
  %v506 = vxor.u32 %v505, 2147483648
  %v507 = vmul.f32 %v506, 1.442695
  %v508 = vpow.pop %v507
  %v509 = vadd.f32 %v508, 1.0
  %v510 = vrcp.pop %v509
  %v511 = vmul.f32 %v509, %v510
  %v512 = vsub.f32 1.0, %v511
  %v513 = vmul.f32 %v510, %v512
  %v514 = vadd.f32 %v510, %v513
  %vm515 = vweird.f32 %v509
  %vm516 = vweird.f32 %v510
  %vm517 = vmor %vm515, %vm516
  %v518 = vsel %vm517, %v510, %v514
  %v519 = vand.u32 2147483647, %v509
  %vm520 = vcmp.eq.f32.partialorder %v519, 8.507059e+37
  %v521 = vand.u32 %v509, 2147483648
  %v522 = vor.u32 1.1754944e-38, %v521
  %v523 = vsel %vm520, %v522, %v518
  %v524 = vmul.f32 1.0, %v523
  %v525 = vtanh.pop %v505
  %v526 = vmul.f32 %v524, %v471
  %528 = vrot.lane.b32.xlu0 %v525, 32
  %v529 = vpop.permute.xlu0 %528
  %v531 = vmul.f32 %v524, %v529
  %533 = vrot.lane.b32.xlu0 %v531, 32
  %v534 = vpop.permute.xlu0 %533
  %v536 = vadd.f32 %v526, %v534
  %v537 = vtanh.pop %v536
  %539 = vrot.lane.b32.xlu0 %v537, 32
  %v540 = vpop.permute.xlu0 %539
  %v542 = vmul.f32 %v524, %v540
  %v543 = vld [vmem:[%s2] sm:$0x3]
  %545 = vrot.lane.b32.xlu0 %v542, 64
  %v546 = vpop.permute.xlu0 %545
  %v547 = vsel %vm26, %v546, 0
  %549 = vmatpush.msra.mxu0 0.0
  %550 = vmatpush.msra.mxu0 0.0
  %551 = vmatpush.msra.mxu0 0.0
  %552 = vmatpush.msra.mxu0 0.0
  %553 = vmatpush.msra.mxu0 0.0
  %554 = vmatpush.msra.mxu0 0.0
  %555 = vmatpush.msra.mxu0 0.0
  %556 = vmatpush.msra.mxu0 0.0
  %557 = vmatpush.msra.mxu0 0.0
  %558 = vmatpush.msra.mxu0 0.0
  %559 = vmatpush.msra.mxu0 0.0
  %560 = vmatpush.msra.mxu0 0.0
  %561 = vmatpush.msra.mxu0 %v24
  %562 = vmatpush.msra.mxu0 %v23
  %563 = vmatpush.msra.mxu0 %v22
  %564 = vmatpush.msra.mxu0 %v21
  %565 = vmatmul.f32.gmra.mxu0 %v547
  %v566 = vpop.f32.mrf.mxu0
  %v567 = vadd.f32 0.0, %v566
  %568 = vdwg.mxu0
  %v569 = vadd.f32 %v543, %v567
  %v570 = vxor.u32 %v569, 2147483648
  %v571 = vmul.f32 %v570, 1.442695
  %v572 = vpow.pop %v571
  %v573 = vadd.f32 %v572, 1.0
  %v574 = vrcp.pop %v573
  %v575 = vmul.f32 %v573, %v574
  %v576 = vsub.f32 1.0, %v575
  %v577 = vmul.f32 %v574, %v576
  %v578 = vadd.f32 %v574, %v577
  %vm579 = vweird.f32 %v573
  %vm580 = vweird.f32 %v574
  %vm581 = vmor %vm579, %vm580
  %v582 = vsel %vm581, %v574, %v578
  %v583 = vand.u32 2147483647, %v573
  %vm584 = vcmp.eq.f32.partialorder %v583, 8.507059e+37
  %v585 = vand.u32 %v573, 2147483648
  %v586 = vor.u32 1.1754944e-38, %v585
  %v587 = vsel %vm584, %v586, %v582
  %v588 = vmul.f32 1.0, %v587
  %v589 = vtanh.pop %v569
  %v590 = vmul.f32 %v588, %v536
  %592 = vrot.lane.b32.xlu0 %v589, 32
  %v593 = vpop.permute.xlu0 %592
  %v595 = vmul.f32 %v588, %v593
  %597 = vrot.lane.b32.xlu0 %v595, 32
  %v598 = vpop.permute.xlu0 %597
  %v600 = vadd.f32 %v590, %v598
  %v601 = vtanh.pop %v600
  %603 = vrot.lane.b32.xlu0 %v601, 32
  %v604 = vpop.permute.xlu0 %603
  %v606 = vmul.f32 %v588, %v604
  %608 = vrot.lane.b32.xlu0 %v606, 64
  %v609 = vpop.permute.xlu0 %608
  %vm611 = vcmask 254976
  %612 = vst.msk [vmem:[%s4] sm:$0x3] %vm611, %v609
  %s613 = scalar_lea.vmem %s2, 2
  %v614 = vld [vmem:[%s613] sm:$0x3]
  %v615 = vsel %vm26, %v609, 0
  %617 = vmatpush.msra.mxu0 0.0
  %618 = vmatpush.msra.mxu0 0.0
  %619 = vmatpush.msra.mxu0 0.0
  %620 = vmatpush.msra.mxu0 0.0
  %621 = vmatpush.msra.mxu0 0.0
  %622 = vmatpush.msra.mxu0 0.0
  %623 = vmatpush.msra.mxu0 0.0
  %624 = vmatpush.msra.mxu0 0.0
  %625 = vmatpush.msra.mxu0 0.0
  %626 = vmatpush.msra.mxu0 0.0
  %627 = vmatpush.msra.mxu0 0.0
  %628 = vmatpush.msra.mxu0 0.0
  %629 = vmatpush.msra.mxu0 %v24
  %630 = vmatpush.msra.mxu0 %v23
  %631 = vmatpush.msra.mxu0 %v22
  %632 = vmatpush.msra.mxu0 %v21
  %633 = vmatmul.f32.gmra.mxu0 %v615
  %v634 = vpop.f32.mrf.mxu0
  %v635 = vadd.f32 0.0, %v634
  %636 = vdwg.mxu0
  %v637 = vadd.f32 %v614, %v635
  %v638 = vxor.u32 %v637, 2147483648
  %v639 = vmul.f32 %v638, 1.442695
  %v640 = vpow.pop %v639
  %v641 = vadd.f32 %v640, 1.0
  %v642 = vrcp.pop %v641
  %v643 = vmul.f32 %v641, %v642
  %v644 = vsub.f32 1.0, %v643
  %v645 = vmul.f32 %v642, %v644
  %v646 = vadd.f32 %v642, %v645
  %vm647 = vweird.f32 %v641
  %vm648 = vweird.f32 %v642
  %vm649 = vmor %vm647, %vm648
  %v650 = vsel %vm649, %v642, %v646
  %v651 = vand.u32 2147483647, %v641
  %vm652 = vcmp.eq.f32.partialorder %v651, 8.507059e+37
  %v653 = vand.u32 %v641, 2147483648
  %v654 = vor.u32 1.1754944e-38, %v653
  %v655 = vsel %vm652, %v654, %v650
  %v656 = vmul.f32 1.0, %v655
  %v657 = vtanh.pop %v637
  %v658 = vmul.f32 %v656, %v600
  %660 = vrot.lane.b32.xlu0 %v657, 32
  %v661 = vpop.permute.xlu0 %660
  %v663 = vmul.f32 %v656, %v661
  %665 = vrot.lane.b32.xlu0 %v663, 32
  %v666 = vpop.permute.xlu0 %665
  %v668 = vadd.f32 %v658, %v666
  %v669 = vtanh.pop %v668
  %671 = vrot.lane.b32.xlu0 %v669, 32
  %v672 = vpop.permute.xlu0 %671
  %v674 = vmul.f32 %v656, %v672
  %676 = vrot.lane.b32.xlu0 %v674, 64
  %v677 = vpop.permute.xlu0 %676
  %s679 = scalar_lea.vmem %s4, 2
  %680 = vst.msk [vmem:[%s679] sm:$0x3] %vm611, %v677
  %s681 = scalar_lea.vmem %s2, 4
  %v682 = vld [vmem:[%s681] sm:$0x3]
  %v683 = vsel %vm26, %v677, 0
  %685 = vmatpush.msra.mxu0 0.0
  %686 = vmatpush.msra.mxu0 0.0
  %687 = vmatpush.msra.mxu0 0.0
  %688 = vmatpush.msra.mxu0 0.0
  %689 = vmatpush.msra.mxu0 0.0
  %690 = vmatpush.msra.mxu0 0.0
  %691 = vmatpush.msra.mxu0 0.0
  %692 = vmatpush.msra.mxu0 0.0
  %693 = vmatpush.msra.mxu0 0.0
  %694 = vmatpush.msra.mxu0 0.0
  %695 = vmatpush.msra.mxu0 0.0
  %696 = vmatpush.msra.mxu0 0.0
  %697 = vmatpush.msra.mxu0 %v24
  %698 = vmatpush.msra.mxu0 %v23
  %699 = vmatpush.msra.mxu0 %v22
  %700 = vmatpush.msra.mxu0 %v21
  %701 = vmatmul.f32.gmra.mxu0 %v683
  %v702 = vpop.f32.mrf.mxu0
  %v703 = vadd.f32 0.0, %v702
  %704 = vdwg.mxu0
  %v705 = vadd.f32 %v682, %v703
  %v706 = vxor.u32 %v705, 2147483648
  %v707 = vmul.f32 %v706, 1.442695
  %v708 = vpow.pop %v707
  %v709 = vadd.f32 %v708, 1.0
  %v710 = vrcp.pop %v709
  %v711 = vmul.f32 %v709, %v710
  %v712 = vsub.f32 1.0, %v711
  %v713 = vmul.f32 %v710, %v712
  %v714 = vadd.f32 %v710, %v713
  %vm715 = vweird.f32 %v709
  %vm716 = vweird.f32 %v710
  %vm717 = vmor %vm715, %vm716
  %v718 = vsel %vm717, %v710, %v714
  %v719 = vand.u32 2147483647, %v709
  %vm720 = vcmp.eq.f32.partialorder %v719, 8.507059e+37
  %v721 = vand.u32 %v709, 2147483648
  %v722 = vor.u32 1.1754944e-38, %v721
  %v723 = vsel %vm720, %v722, %v718
  %v724 = vmul.f32 1.0, %v723
  %v725 = vtanh.pop %v705
  %v726 = vmul.f32 %v724, %v668
  %728 = vrot.lane.b32.xlu0 %v725, 32
  %v729 = vpop.permute.xlu0 %728
  %v731 = vmul.f32 %v724, %v729
  %733 = vrot.lane.b32.xlu0 %v731, 32
  %v734 = vpop.permute.xlu0 %733
  %v736 = vadd.f32 %v726, %v734
  %v737 = vtanh.pop %v736
  %739 = vrot.lane.b32.xlu0 %v737, 32
  %v740 = vpop.permute.xlu0 %739
  %v742 = vmul.f32 %v724, %v740
  %744 = vrot.lane.b32.xlu0 %v742, 64
  %v745 = vpop.permute.xlu0 %744
  %s747 = scalar_lea.vmem %s4, 4
  %748 = vst.msk [vmem:[%s747] sm:$0x3] %vm611, %v745
  %s749 = scalar_lea.vmem %s2, 6
  %v750 = vld [vmem:[%s749] sm:$0x3]
  %v751 = vsel %vm26, %v745, 0
  %753 = vmatpush.msra.mxu0 0.0
  %754 = vmatpush.msra.mxu0 0.0
  %755 = vmatpush.msra.mxu0 0.0
  %756 = vmatpush.msra.mxu0 0.0
  %757 = vmatpush.msra.mxu0 0.0
  %758 = vmatpush.msra.mxu0 0.0
  %759 = vmatpush.msra.mxu0 0.0
  %760 = vmatpush.msra.mxu0 0.0
  %761 = vmatpush.msra.mxu0 0.0
  %762 = vmatpush.msra.mxu0 0.0
  %763 = vmatpush.msra.mxu0 0.0
  %764 = vmatpush.msra.mxu0 0.0
  %765 = vmatpush.msra.mxu0 %v24
  %766 = vmatpush.msra.mxu0 %v23
  %767 = vmatpush.msra.mxu0 %v22
  %768 = vmatpush.msra.mxu0 %v21
  %769 = vmatmul.f32.gmra.mxu0 %v751
  %v770 = vpop.f32.mrf.mxu0
  %v771 = vadd.f32 0.0, %v770
  %772 = vdwg.mxu0
  %v773 = vadd.f32 %v750, %v771
  %v774 = vxor.u32 %v773, 2147483648
  %v775 = vmul.f32 %v774, 1.442695
  %v776 = vpow.pop %v775
  %v777 = vadd.f32 %v776, 1.0
  %v778 = vrcp.pop %v777
  %v779 = vmul.f32 %v777, %v778
  %v780 = vsub.f32 1.0, %v779
  %v781 = vmul.f32 %v778, %v780
  %v782 = vadd.f32 %v778, %v781
  %vm783 = vweird.f32 %v777
  %vm784 = vweird.f32 %v778
  %vm785 = vmor %vm783, %vm784
  %v786 = vsel %vm785, %v778, %v782
  %v787 = vand.u32 2147483647, %v777
  %vm788 = vcmp.eq.f32.partialorder %v787, 8.507059e+37
  %v789 = vand.u32 %v777, 2147483648
  %v790 = vor.u32 1.1754944e-38, %v789
  %v791 = vsel %vm788, %v790, %v786
  %v792 = vmul.f32 1.0, %v791
  %v793 = vtanh.pop %v773
  %v794 = vmul.f32 %v792, %v736
  %796 = vrot.lane.b32.xlu0 %v793, 32
  %v797 = vpop.permute.xlu0 %796
  %v799 = vmul.f32 %v792, %v797
  %801 = vrot.lane.b32.xlu0 %v799, 32
  %v802 = vpop.permute.xlu0 %801
  %v804 = vadd.f32 %v794, %v802
  %v805 = vtanh.pop %v804
  %807 = vrot.lane.b32.xlu0 %v805, 32
  %v808 = vpop.permute.xlu0 %807
  %v810 = vmul.f32 %v792, %v808
  %812 = vrot.lane.b32.xlu0 %v810, 64
  %v813 = vpop.permute.xlu0 %812
  %s815 = scalar_lea.vmem %s4, 6
  %816 = vst.msk [vmem:[%s815] sm:$0x3] %vm611, %v813
  %s817 = scalar_lea.vmem %s2, 8
  %v818 = vld [vmem:[%s817] sm:$0x3]
  %v819 = vsel %vm26, %v813, 0
  %821 = vmatpush.msra.mxu0 0.0
  %822 = vmatpush.msra.mxu0 0.0
  %823 = vmatpush.msra.mxu0 0.0
  %824 = vmatpush.msra.mxu0 0.0
  %825 = vmatpush.msra.mxu0 0.0
  %826 = vmatpush.msra.mxu0 0.0
  %827 = vmatpush.msra.mxu0 0.0
  %828 = vmatpush.msra.mxu0 0.0
  %829 = vmatpush.msra.mxu0 0.0
  %830 = vmatpush.msra.mxu0 0.0
  %831 = vmatpush.msra.mxu0 0.0
  %832 = vmatpush.msra.mxu0 0.0
  %833 = vmatpush.msra.mxu0 %v24
  %834 = vmatpush.msra.mxu0 %v23
  %835 = vmatpush.msra.mxu0 %v22
  %836 = vmatpush.msra.mxu0 %v21
  %837 = vmatmul.f32.gmra.mxu0 %v819
  %v838 = vpop.f32.mrf.mxu0
  %v839 = vadd.f32 0.0, %v838
  %840 = vdwg.mxu0
  %v841 = vadd.f32 %v818, %v839
  %v842 = vxor.u32 %v841, 2147483648
  %v843 = vmul.f32 %v842, 1.442695
  %v844 = vpow.pop %v843
  %v845 = vadd.f32 %v844, 1.0
  %v846 = vrcp.pop %v845
  %v847 = vmul.f32 %v845, %v846
  %v848 = vsub.f32 1.0, %v847
  %v849 = vmul.f32 %v846, %v848
  %v850 = vadd.f32 %v846, %v849
  %vm851 = vweird.f32 %v845
  %vm852 = vweird.f32 %v846
  %vm853 = vmor %vm851, %vm852
  %v854 = vsel %vm853, %v846, %v850
  %v855 = vand.u32 2147483647, %v845
  %vm856 = vcmp.eq.f32.partialorder %v855, 8.507059e+37
  %v857 = vand.u32 %v845, 2147483648
  %v858 = vor.u32 1.1754944e-38, %v857
  %v859 = vsel %vm856, %v858, %v854
  %v860 = vmul.f32 1.0, %v859
  %v861 = vtanh.pop %v841
  %v862 = vmul.f32 %v860, %v804
  %864 = vrot.lane.b32.xlu0 %v861, 32
  %v865 = vpop.permute.xlu0 %864
  %v867 = vmul.f32 %v860, %v865
  %869 = vrot.lane.b32.xlu0 %v867, 32
  %v870 = vpop.permute.xlu0 %869
  %v872 = vadd.f32 %v862, %v870
  %v873 = vtanh.pop %v872
  %875 = vrot.lane.b32.xlu0 %v873, 32
  %v876 = vpop.permute.xlu0 %875
  %v878 = vmul.f32 %v860, %v876
  %880 = vrot.lane.b32.xlu0 %v878, 64
  %v881 = vpop.permute.xlu0 %880
  %s883 = scalar_lea.vmem %s4, 8
  %884 = vst.msk [vmem:[%s883] sm:$0x3] %vm611, %v881
  %s885 = scalar_lea.vmem %s2, 10
  %v886 = vld [vmem:[%s885] sm:$0x3]
  %v887 = vsel %vm26, %v881, 0
  %889 = vmatpush.msra.mxu0 0.0
  %890 = vmatpush.msra.mxu0 0.0
  %891 = vmatpush.msra.mxu0 0.0
  %892 = vmatpush.msra.mxu0 0.0
  %893 = vmatpush.msra.mxu0 0.0
  %894 = vmatpush.msra.mxu0 0.0
  %895 = vmatpush.msra.mxu0 0.0
  %896 = vmatpush.msra.mxu0 0.0
  %897 = vmatpush.msra.mxu0 0.0
  %898 = vmatpush.msra.mxu0 0.0
  %899 = vmatpush.msra.mxu0 0.0
  %900 = vmatpush.msra.mxu0 0.0
  %901 = vmatpush.msra.mxu0 %v24
  %902 = vmatpush.msra.mxu0 %v23
  %903 = vmatpush.msra.mxu0 %v22
  %904 = vmatpush.msra.mxu0 %v21
  %905 = vmatmul.f32.gmra.mxu0 %v887
  %v906 = vpop.f32.mrf.mxu0
  %v907 = vadd.f32 0.0, %v906
  %908 = vdwg.mxu0
  %v909 = vadd.f32 %v886, %v907
  %v910 = vxor.u32 %v909, 2147483648
  %v911 = vmul.f32 %v910, 1.442695
  %v912 = vpow.pop %v911
  %v913 = vadd.f32 %v912, 1.0
  %v914 = vrcp.pop %v913
  %v915 = vmul.f32 %v913, %v914
  %v916 = vsub.f32 1.0, %v915
  %v917 = vmul.f32 %v914, %v916
  %v918 = vadd.f32 %v914, %v917
  %vm919 = vweird.f32 %v913
  %vm920 = vweird.f32 %v914
  %vm921 = vmor %vm919, %vm920
  %v922 = vsel %vm921, %v914, %v918
  %v923 = vand.u32 2147483647, %v913
  %vm924 = vcmp.eq.f32.partialorder %v923, 8.507059e+37
  %v925 = vand.u32 %v913, 2147483648
  %v926 = vor.u32 1.1754944e-38, %v925
  %v927 = vsel %vm924, %v926, %v922
  %v928 = vmul.f32 1.0, %v927
  %v929 = vtanh.pop %v909
  %v930 = vmul.f32 %v928, %v872
  %932 = vrot.lane.b32.xlu0 %v929, 32
  %v933 = vpop.permute.xlu0 %932
  %v935 = vmul.f32 %v928, %v933
  %937 = vrot.lane.b32.xlu0 %v935, 32
  %v938 = vpop.permute.xlu0 %937
  %v940 = vadd.f32 %v930, %v938
  %v941 = vtanh.pop %v940
  %943 = vrot.lane.b32.xlu0 %v941, 32
  %v944 = vpop.permute.xlu0 %943
  %v946 = vmul.f32 %v928, %v944
  %948 = vrot.lane.b32.xlu0 %v946, 64
  %v949 = vpop.permute.xlu0 %948
  %s951 = scalar_lea.vmem %s4, 10
  %952 = vst.msk [vmem:[%s951] sm:$0x3] %vm611, %v949
  %s953 = scalar_lea.vmem %s2, 12
  %v954 = vld [vmem:[%s953] sm:$0x3]
  %v955 = vsel %vm26, %v949, 0
  %957 = vmatpush.msra.mxu0 0.0
  %958 = vmatpush.msra.mxu0 0.0
  %959 = vmatpush.msra.mxu0 0.0
  %960 = vmatpush.msra.mxu0 0.0
  %961 = vmatpush.msra.mxu0 0.0
  %962 = vmatpush.msra.mxu0 0.0
  %963 = vmatpush.msra.mxu0 0.0
  %964 = vmatpush.msra.mxu0 0.0
  %965 = vmatpush.msra.mxu0 0.0
  %966 = vmatpush.msra.mxu0 0.0
  %967 = vmatpush.msra.mxu0 0.0
  %968 = vmatpush.msra.mxu0 0.0
  %969 = vmatpush.msra.mxu0 %v24
  %970 = vmatpush.msra.mxu0 %v23
  %971 = vmatpush.msra.mxu0 %v22
  %972 = vmatpush.msra.mxu0 %v21
  %973 = vmatmul.f32.gmra.mxu0 %v955
  %v974 = vpop.f32.mrf.mxu0
  %v975 = vadd.f32 0.0, %v974
  %976 = vdwg.mxu0
  %v977 = vadd.f32 %v954, %v975
  %v978 = vxor.u32 %v977, 2147483648
  %v979 = vmul.f32 %v978, 1.442695
  %v980 = vpow.pop %v979
  %v981 = vadd.f32 %v980, 1.0
  %v982 = vrcp.pop %v981
  %v983 = vmul.f32 %v981, %v982
  %v984 = vsub.f32 1.0, %v983
  %v985 = vmul.f32 %v982, %v984
  %v986 = vadd.f32 %v982, %v985
  %vm987 = vweird.f32 %v981
  %vm988 = vweird.f32 %v982
  %vm989 = vmor %vm987, %vm988
  %v990 = vsel %vm989, %v982, %v986
  %v991 = vand.u32 2147483647, %v981
  %vm992 = vcmp.eq.f32.partialorder %v991, 8.507059e+37
  %v993 = vand.u32 %v981, 2147483648
  %v994 = vor.u32 1.1754944e-38, %v993
  %v995 = vsel %vm992, %v994, %v990
  %v996 = vmul.f32 1.0, %v995
  %v997 = vtanh.pop %v977
  %v998 = vmul.f32 %v996, %v940
  %1000 = vrot.lane.b32.xlu0 %v997, 32
  %v1001 = vpop.permute.xlu0 %1000
  %v1003 = vmul.f32 %v996, %v1001
  %1005 = vrot.lane.b32.xlu0 %v1003, 32
  %v1006 = vpop.permute.xlu0 %1005
  %v1008 = vadd.f32 %v998, %v1006
  %v1009 = vtanh.pop %v1008
  %1011 = vrot.lane.b32.xlu0 %v1009, 32
  %v1012 = vpop.permute.xlu0 %1011
  %v1014 = vmul.f32 %v996, %v1012
  %1016 = vrot.lane.b32.xlu0 %v1014, 64
  %v1017 = vpop.permute.xlu0 %1016
  %s1019 = scalar_lea.vmem %s4, 12
  %1020 = vst.msk [vmem:[%s1019] sm:$0x3] %vm611, %v1017
  // Predicated region
  $region18: #{seq2seq_forward.6} parent=0 // pred_check
    _
  $region19: #{seq2seq_forward.6} parent=0 // pred_check_branch
    %1022 = sbr.rel (0) target = $region21
  $region20: #{seq2seq_forward.6} parent=0 // pred_region
    _
  $region21: #{seq2seq_forward.6} parent=0 // pred_fallthru
    _
  // Predicated region
  $region22: #{seq2seq_forward.6} parent=0 // pred_check
    _
  $region23: #{seq2seq_forward.6} parent=0 // pred_check_branch
    %1024 = sbr.rel (0) target = $region25
  $region24: #{seq2seq_forward.6} parent=0 // pred_region
    _
  $region25: #{seq2seq_forward.6} parent=0 // pred_fallthru
    _

</llo_original>
